<compile_context>
chip_gen: v7x
topology: tpu7x:2x2x1
jax: 0.10.0
libtpu: 0.0.40
codegen_flags: <defaults>
</compile_context>

<pallas_src>
import jax
import jax.numpy as jnp
from jax import lax
from jax.experimental import pallas as pl
from jax.experimental.pallas import tpu as pltpu

# ---- synthetic backbone config (small, consistent with the module's forward) ----
PATCH = 16          # patch size of the patch-embed conv
C_IN = 3            # RGB
D = 32              # hidden dim
NH = 4              # attention heads
HD = D // NH
MLP = 4 * D
LAYERS = 2          # "layer_num" (real checkpoints use 24/48; small here)
POS_GRID = 64       # pos_embed stored as 1 + 64*64 tokens (hard-coded in pretrain_forward)
LN_EPS = 1e-6

IMAGENET_MEAN = jnp.array([0.485, 0.456, 0.406], jnp.float32).reshape(1, 3, 1, 1)
IMAGENET_STD = jnp.array([0.229, 0.224, 0.225], jnp.float32).reshape(1, 3, 1, 1)


# ----------------------------- in-kernel helpers ---------------------------------
def _layer_norm(x, w, b):
    mu = jnp.mean(x, axis=-1, keepdims=True)
    xc = x - mu
    var = jnp.mean(xc * xc, axis=-1, keepdims=True)
    return xc * lax.rsqrt(var + LN_EPS) * w + b


def _gelu(x):
    # tanh-approx GELU (EUP tanh), f32 math.
    return 0.5 * x * (1.0 + jnp.tanh(0.7978845608028654 * (x + 0.044715 * x * x * x)))


# --------------------- kernel 1: patch-embed + cls/pos addend ---------------------
def _make_embed_kernel(B):
    def kernel(xp_ref, pw_ref, pb_ref, add_ref, o_ref):
        # patch-embed as one bf16 matmul, f32 accumulation
        pe = jnp.dot(xp_ref[...], pw_ref[...],
                     preferred_element_type=jnp.float32) + pb_ref[...]       # (B*P, D)
        # two sliced stores (no concat / extra temporary):
        #   rows [0:B]  = cls tokens (cls_token + cls_pos, precomputed host-side)
        #   rows [B: ]  = resized patch pos-embed + patch embeddings
        o_ref[0:B, :] = add_ref[0:B, :]
        o_ref[B:, :] = add_ref[B:, :] + pe
    return kernel


def patch_embed_tokens(xp2d, addend, params, B, P, L):
    BL = B * L
    BP = B * P
    KP = xp2d.shape[1]
    return pl.pallas_call(
        _make_embed_kernel(B),
        out_shape=jax.ShapeDtypeStruct((BL, D), jnp.float32),
        grid=(1,),
        in_specs=[
            pl.BlockSpec((BP, KP), lambda i: (0, 0)),   # patchified pixels (bf16)
            pl.BlockSpec((KP, D), lambda i: (0, 0)),    # patch_w (bf16)
            pl.BlockSpec((1, D), lambda i: (0, 0)),     # patch_b
            pl.BlockSpec((BL, D), lambda i: (0, 0)),    # cls + pos-embed addend
        ],
        out_specs=pl.BlockSpec((BL, D), lambda i: (0, 0)),
    )(xp2d, params['patch_w'], params['patch_b'], addend)


# ------------------- kernel 2: all transformer layers + final LN ------------------
def _layers_kernel(x0_hbm, bidr_ref, bidc_ref,
                   ln1w_ref, ln1b_ref, wqkv_ref, bqkv_ref, wo_ref, bo_ref,
                   ln2w_ref, ln2b_ref, w1_ref, b1_ref, w2_ref, b2_ref,
                   lnfw_ref, lnfb_ref, o_ref, sem):
    l = pl.program_id(0)

    # Layer 0: pull the initial token stream from HBM straight into the resident
    # output block (x0 is never held in VMEM beyond this point).
    @pl.when(l == 0)
    def _():
        cp = pltpu.make_async_copy(x0_hbm, o_ref, sem)
        cp.start()
        cp.wait()

    x = o_ref[...]                                          # (BL, D) f32 residual stream

    # block-diagonal mask built in-kernel from tiny batch-id vectors (no (BL,BL) input)
    same_img = bidr_ref[...] == bidc_ref[...]               # (BL, BL) bool

    scale = 1.0 / (HD ** 0.5)

    # ---- multi-head self-attention (pre-LN) ----
    h = _layer_norm(x, ln1w_ref[0], ln1b_ref[0])
    qkv = jnp.dot(h.astype(jnp.bfloat16), wqkv_ref[0],
                  preferred_element_type=jnp.float32) + bqkv_ref[0]          # (BL, 3D)

    # TODO(synk): at real sizes replace with flash-style KV tiling (online softmax).
    ctx_heads = []
    for n in range(NH):
        qn = qkv[:, n * HD:(n + 1) * HD].astype(jnp.bfloat16)
        kn = qkv[:, D + n * HD:D + (n + 1) * HD].astype(jnp.bfloat16)
        vn = qkv[:, 2 * D + n * HD:2 * D + (n + 1) * HD].astype(jnp.bfloat16)
        s = lax.dot_general(qn, kn, (((1,), (1,)), ((), ())),                # q @ k^T
                            preferred_element_type=jnp.float32) * scale      # (BL, BL) f32
        s = jnp.where(same_img, s, -1e30)                   # f32 mask (no cross-image)
        s = s - jnp.max(s, axis=-1, keepdims=True)
        p = jnp.exp(s)
        p = p * pl.reciprocal(jnp.sum(p, axis=-1, keepdims=True), approx=True)
        ctx_heads.append(jnp.dot(p.astype(jnp.bfloat16), vn,
                                 preferred_element_type=jnp.float32))        # (BL, HD)
    ctx = jnp.concatenate(ctx_heads, axis=-1)               # (BL, D), head-major lanes

    # dense output projection: one K=D matmul (no per-head matmuls / head reduction)
    x = x + jnp.dot(ctx.astype(jnp.bfloat16), wo_ref[0],
                    preferred_element_type=jnp.float32) + bo_ref[0]

    # ---- MLP (pre-LN) ----
    h2 = _layer_norm(x, ln2w_ref[0], ln2b_ref[0])
    m = _gelu(jnp.dot(h2.astype(jnp.bfloat16), w1_ref[0],
                      preferred_element_type=jnp.float32) + b1_ref[0])
    x = x + jnp.dot(m.astype(jnp.bfloat16), w2_ref[0],
                    preferred_element_type=jnp.float32) + b2_ref[0]

    last = pl.num_programs(0) - 1

    @pl.when(l < last)
    def _():
        o_ref[...] = x

    # final LayerNorm fused into the last layer's writeback
    @pl.when(l == last)
    def _():
        o_ref[...] = _layer_norm(x, lnfw_ref[...], lnfb_ref[...])


def transformer_layers(x0, bid_row, bid_col, params, BL):
    def stacked(shape):
        r = len(shape)
        return pl.BlockSpec((1,) + tuple(shape), lambda l, _r=r: (l,) + (0,) * _r)

    def const(shape):
        r = len(shape)
        return pl.BlockSpec(tuple(shape), lambda l, _r=r: (0,) * _r)

    # Explicit VMEM budget: resident residual stream + double-buffered per-layer
    # weights/biases + per-step score/intermediate temporaries, with 4x margin.
    per_layer_bytes = 2 * (D * 3 * D + D * D + 2 * D * MLP) + 4 * (3 * D + MLP + 8 * D)
    resident_bytes = 4 * (BL * D + (NH + 2) * BL * BL + 3 * BL * D + 4 * BL + 2 * D)
    vmem_limit = int(min(64 << 20, max(16 << 20,
                                       4 * (2 * per_layer_bytes + resident_bytes))))

    return pl.pallas_call(
        _layers_kernel,
        out_shape=jax.ShapeDtypeStruct((BL, D), jnp.float32),
        grid=(LAYERS,),
        in_specs=[
            pl.BlockSpec(memory_space=pl.ANY),     # x0 stays in HBM; DMA'd once at l==0
            const((BL, 1)), const((1, BL)),        # batch-id row / col vectors (int32)
            stacked((1, D)), stacked((1, D)),      # ln1 w, b
            stacked((D, 3 * D)), stacked((1, 3 * D)),   # fused qkv
            stacked((D, D)), stacked((1, D)),      # attn out proj
            stacked((1, D)), stacked((1, D)),      # ln2 w, b
            stacked((D, MLP)), stacked((1, MLP)),  # mlp fc1
            stacked((MLP, D)), stacked((1, D)),    # mlp fc2
            const((1, D)), const((1, D)),          # final ln
        ],
        out_specs=pl.BlockSpec((BL, D), lambda l: (0, 0)),
        scratch_shapes=[pltpu.SemaphoreType.DMA(())],
        compiler_params=pltpu.CompilerParams(
            dimension_semantics=("arbitrary",),
            vmem_limit_bytes=vmem_limit),
    )(x0, bid_row, bid_col,
      params['ln1_w'], params['ln1_b'], params['wqkv'], params['bqkv'],
      params['wo'], params['bo'], params['ln2_w'], params['ln2_b'],
      params['w1'], params['b1'], params['w2'], params['b2'],
      params['ln_f_w'], params['ln_f_b'])


# --------------------------- plain-JAX glue (no hot compute) ----------------------
def _cubic_weight(t, a=-0.75):
    at = jnp.abs(t)
    w1 = ((a + 2.0) * at - (a + 3.0)) * at * at + 1.0
    w2 = (((at - 5.0) * at + 8.0) * at - 4.0) * a
    return jnp.where(at <= 1.0, w1, jnp.where(at < 2.0, w2, 0.0))


def _bicubic_matrix(in_size, out_size):
    # Matrix for torch.nn.functional.interpolate(mode='bicubic', align_corners=False)
    # along one axis (no antialias).
    scale = in_size / out_size
    dst = jnp.arange(out_size, dtype=jnp.float32)
    src = (dst + 0.5) * scale - 0.5
    i0 = jnp.floor(src)
    frac = src - i0
    M = jnp.zeros((out_size, in_size), jnp.float32)
    rows = jnp.arange(out_size)
    for k in range(-1, 3):
        idx = jnp.clip(i0 + k, 0, in_size - 1).astype(jnp.int32)
        M = M.at[rows, idx].add(_cubic_weight(frac - k))
    return M


def _patchify(x):
    # (B, C, H, W) -> (B, P, C*ph*pw), patch order row-major over (hp, wp),
    # vector order (c, kh, kw) to match conv-weight flattening.
    B, C, H, W = x.shape
    hp, wp = H // PATCH, W // PATCH
    x = x.reshape(B, C, hp, PATCH, wp, PATCH)
    x = x.transpose(0, 2, 4, 1, 3, 5)
    return x.reshape(B, hp * wp, C * PATCH * PATCH), hp, wp


@jax.jit
def sapiens_wrapper_forward(image, params):
    """Equivalent of SapiensWrapper_ts.forward(image, use_my_proces=True)."""
    # --- my_processor: Normalize(mean, std) (img_size=None -> no resize) ---
    x = (image - IMAGENET_MEAN) / IMAGENET_STD

    B = x.shape[0]
    xp, hp, wp = _patchify(x)                                # (B, P, C*ph*pw)
    P = hp * wp
    L = 1 + P
    BL = B * L
    xp2d = xp.reshape(B * P, -1).astype(jnp.bfloat16)

    # --- pos embed: bicubic resize of the 64x64 grid -> (hp, wp) ---
    cls_pos = params['pos_embed'][:, 0, :]                               # (1, D)
    patch_pos = params['pos_embed'][:, 1:, :].reshape(POS_GRID, POS_GRID, D)
    Mh = _bicubic_matrix(POS_GRID, hp)
    Mw = _bicubic_matrix(POS_GRID, wp)
    pp = jnp.einsum('ph,hwd->pwd', Mh, patch_pos)
    pp = jnp.einsum('qw,pwd->pqd', Mw, pp).reshape(P, D)                 # (P, D)

    # Token layout: rows [0:B] cls tokens, rows [B:] patch tokens in (batch, patch)
    # order.  addend = cls_token + cls_pos for cls rows; resized patch pos-embed
    # (tiled over batch) for patch rows.
    cls_row = params['cls_token'].reshape(1, D) + cls_pos                # (1, D)
    addend = jnp.concatenate([jnp.broadcast_to(cls_row, (B, D)),
                              jnp.tile(pp, (B, 1))], axis=0)             # (B*L, D)

    # Tiny batch-id vectors for the in-kernel block-diagonal mask.
    bid = jnp.concatenate([jnp.arange(B, dtype=jnp.int32),
                           jnp.repeat(jnp.arange(B, dtype=jnp.int32), P)])
    bid_row = bid.reshape(BL, 1)
    bid_col = bid.reshape(1, BL)

    x0 = patch_embed_tokens(xp2d, addend, params, B, P, L)               # (B*L, D)
    out2d = transformer_layers(x0, bid_row, bid_col, params, BL)         # (B*L, D)

    # drop cls rows; wrapper's rearrange 'n dim h w -> n (h w) dim' == patch tokens
    return out2d[B:, :].reshape(B, P, D)                                 # (N, h*w, dim)


# --------------------------- deterministic parameter init -------------------------
def init_params(key):
    ks = jax.random.split(key, 3 + 4 * LAYERS)

    def nrm(k, shape, scale=0.02):
        return scale * jax.random.normal(k, shape, jnp.float32)

    wqkv_l, wo_l, w1_l, w2_l = [], [], [], []
    ki = 3
    for _ in range(LAYERS):
        # Fused QKV weight, output columns ordered [q | k | v], each head-major
        # (column = qkv_block*D + head*HD + h).  For a real torch checkpoint the
        # standard interleaved layout would be permuted host-side to this order.
        wqkv_l.append(nrm(ks[ki + 0], (D, 3 * D)))
        # Out-proj rows ordered head-major (row = head*HD + h) to match the lane
        # order of the in-kernel context concatenation.
        wo_l.append(nrm(ks[ki + 1], (D, D)))
        w1_l.append(nrm(ks[ki + 2], (D, MLP)))
        w2_l.append(nrm(ks[ki + 3], (MLP, D)))
        ki += 4

    st_bf16 = lambda xs: jnp.stack(xs).astype(jnp.bfloat16)

    return {
        'patch_w': nrm(ks[0], (C_IN * PATCH * PATCH, D)).astype(jnp.bfloat16),
        'patch_b': jnp.zeros((1, D), jnp.float32),
        'cls_token': nrm(ks[1], (1, 1, D)),
        'pos_embed': nrm(ks[2], (1, 1 + POS_GRID * POS_GRID, D)),
        'ln1_w': jnp.ones((LAYERS, 1, D), jnp.float32),
        'ln1_b': jnp.zeros((LAYERS, 1, D), jnp.float32),
        'ln2_w': jnp.ones((LAYERS, 1, D), jnp.float32),
        'ln2_b': jnp.zeros((LAYERS, 1, D), jnp.float32),
        'wqkv': st_bf16(wqkv_l),
        'bqkv': jnp.zeros((LAYERS, 1, 3 * D), jnp.float32),
        'wo': st_bf16(wo_l),
        'bo': jnp.zeros((LAYERS, 1, D), jnp.float32),
        'w1': st_bf16(w1_l),
        'b1': jnp.zeros((LAYERS, 1, MLP), jnp.float32),
        'w2': st_bf16(w2_l),
        'b2': jnp.zeros((LAYERS, 1, D), jnp.float32),
        'ln_f_w': jnp.ones((1, D), jnp.float32),
        'ln_f_b': jnp.zeros((1, D), jnp.float32),
    }


if __name__ == "__main__":
    key = jax.random.PRNGKey(0)
    kp, kx = jax.random.split(key)
    params = init_params(kp)

    # image: (N, C, H, W) = (2, 3, 32, 32), values in [0, 1]
    image = jax.random.uniform(kx, (2, 3, 32, 32), jnp.float32)

    out = sapiens_wrapper_forward(image, params)
    out = jax.block_until_ready(out)

    N, C, H, W = image.shape
    hp, wp = H // PATCH, W // PATCH
    assert out.shape == (N, hp * wp, D), out.shape
    assert bool(jnp.all(jnp.isfinite(out)))
    print("KERNEL_OK")
</pallas_src>

<mosaic_0001>
module attributes {stable_mosaic.version = 11 : i64} {
  func.func @kernel(%arg0: i32, %arg1: memref<8x768xbf16, #tpu.memory_space<vmem>>, %arg2: memref<768x32xbf16, #tpu.memory_space<vmem>>, %arg3: memref<1x32xf32, #tpu.memory_space<vmem>>, %arg4: memref<10x32xf32, #tpu.memory_space<vmem>>, %arg5: memref<10x32xf32, #tpu.memory_space<vmem>>) attributes {dimension_semantics = [#tpu.dimension_semantics<arbitrary>], iteration_bounds = array<i64: 1>, scalar_prefetch = 0 : i64, scratch_operands = 0 : i64, tpu.core_type = #tpu.core_type<tc>, window_params = [{pipeline_mode = #tpu.pipeline_mode<synchronous>, transform_indices = @transform_0, window_bounds = array<i64: 8, 768>}, {pipeline_mode = #tpu.pipeline_mode<synchronous>, transform_indices = @transform_1, window_bounds = array<i64: 768, 32>}, {pipeline_mode = #tpu.pipeline_mode<synchronous>, transform_indices = @transform_2, window_bounds = array<i64: 1, 32>}, {pipeline_mode = #tpu.pipeline_mode<synchronous>, transform_indices = @transform_3, window_bounds = array<i64: 10, 32>}, {pipeline_mode = #tpu.pipeline_mode<synchronous>, transform_indices = @transform_4, window_bounds = array<i64: 10, 32>}]} {
    %c0 = arith.constant 0 : index
    %c0_0 = arith.constant 0 : index
    %0 = vector.load %arg1[%c0, %c0_0] : memref<8x768xbf16, #tpu.memory_space<vmem>>, vector<8x768xbf16>
    %c0_1 = arith.constant 0 : index
    %c0_2 = arith.constant 0 : index
    %1 = vector.load %arg2[%c0_1, %c0_2] : memref<768x32xbf16, #tpu.memory_space<vmem>>, vector<768x32xbf16>
    %cst = arith.constant dense<0.000000e+00> : vector<8x32xf32>
    %2 = tpu.matmul %0, %1, %cst {dimension_numbers = #tpu.dot_dimension_numbers<[1], [0], [0], [1], [0, 0, 1, 1], [], []>} : vector<8x768xbf16>, vector<768x32xbf16>, vector<8x32xf32> -> vector<8x32xf32>
    %c0_3 = arith.constant 0 : index
    %c0_4 = arith.constant 0 : index
    %3 = vector.load %arg3[%c0_3, %c0_4] : memref<1x32xf32, #tpu.memory_space<vmem>>, vector<1x32xf32>
    %4 = vector.broadcast %3 : vector<1x32xf32> to vector<8x32xf32>
    %5 = arith.addf %2, %4 : vector<8x32xf32>
    %c0_5 = arith.constant 0 : index
    %c0_6 = arith.constant 0 : index
    %6 = vector.load %arg4[%c0_5, %c0_6] : memref<10x32xf32, #tpu.memory_space<vmem>>, vector<2x32xf32>
    %c0_7 = arith.constant 0 : index
    %c0_8 = arith.constant 0 : index
    %7 = vector.load %arg5[%c0_7, %c0_8] : memref<10x32xf32, #tpu.memory_space<vmem>>, vector<2x32xf32>
    tpu.vector_store %arg5[%c0_7, %c0_8], %6 {strides = array<i32>} : memref<10x32xf32, #tpu.memory_space<vmem>>, vector<2x32xf32>,
    %c2 = arith.constant 2 : index
    %c0_9 = arith.constant 0 : index
    %8 = vector.load %arg4[%c2, %c0_9] : memref<10x32xf32, #tpu.memory_space<vmem>>, vector<8x32xf32>
    %9 = arith.addf %8, %5 : vector<8x32xf32>
    %c2_10 = arith.constant 2 : index
    %c0_11 = arith.constant 0 : index
    %10 = vector.load %arg5[%c2_10, %c0_11] : memref<10x32xf32, #tpu.memory_space<vmem>>, vector<8x32xf32>
    tpu.vector_store %arg5[%c2_10, %c0_11], %9 {strides = array<i32>} : memref<10x32xf32, #tpu.memory_space<vmem>>, vector<8x32xf32>,
    return
  }
  func.func @transform_0(%arg0: i32) -> (i32, i32) {
    %c0_i32 = arith.constant 0 : i32
    %c0_i32_0 = arith.constant 0 : i32
    %c0_i32_1 = arith.constant 0 : i32
    return %c0_i32, %c0_i32_0 : i32, i32
  }
  func.func @transform_1(%arg0: i32) -> (i32, i32) {
    %c0_i32 = arith.constant 0 : i32
    %c0_i32_0 = arith.constant 0 : i32
    %c0_i32_1 = arith.constant 0 : i32
    return %c0_i32, %c0_i32_0 : i32, i32
  }
  func.func @transform_2(%arg0: i32) -> (i32, i32) {
    %c0_i32 = arith.constant 0 : i32
    %c0_i32_0 = arith.constant 0 : i32
    %c0_i32_1 = arith.constant 0 : i32
    return %c0_i32, %c0_i32_0 : i32, i32
  }
  func.func @transform_3(%arg0: i32) -> (i32, i32) {
    %c0_i32 = arith.constant 0 : i32
    %c0_i32_0 = arith.constant 0 : i32
    %c0_i32_1 = arith.constant 0 : i32
    return %c0_i32, %c0_i32_0 : i32, i32
  }
  func.func @transform_4(%arg0: i32) -> (i32, i32) {
    %c0_i32 = arith.constant 0 : i32
    %c0_i32_0 = arith.constant 0 : i32
    %c0_i32_1 = arith.constant 0 : i32
    return %c0_i32, %c0_i32_0 : i32, i32
  }
}

module attributes {stable_mosaic.version = 11 : i64} {
  func.func @_layers_kernel(%arg0: i32, %arg1: memref<10x32xf32, #tpu.memory_space<any>>, %arg2: memref<10x1xi32, #tpu.memory_space<vmem>>, %arg3: memref<1x10xi32, #tpu.memory_space<vmem>>, %arg4: memref<1x1x32xf32, #tpu.memory_space<vmem>>, %arg5: memref<1x1x32xf32, #tpu.memory_space<vmem>>, %arg6: memref<1x32x96xbf16, #tpu.memory_space<vmem>>, %arg7: memref<1x1x96xf32, #tpu.memory_space<vmem>>, %arg8: memref<1x32x32xbf16, #tpu.memory_space<vmem>>, %arg9: memref<1x1x32xf32, #tpu.memory_space<vmem>>, %arg10: memref<1x1x32xf32, #tpu.memory_space<vmem>>, %arg11: memref<1x1x32xf32, #tpu.memory_space<vmem>>, %arg12: memref<1x32x128xbf16, #tpu.memory_space<vmem>>, %arg13: memref<1x1x128xf32, #tpu.memory_space<vmem>>, %arg14: memref<1x128x32xbf16, #tpu.memory_space<vmem>>, %arg15: memref<1x1x32xf32, #tpu.memory_space<vmem>>, %arg16: memref<1x32xf32, #tpu.memory_space<vmem>>, %arg17: memref<1x32xf32, #tpu.memory_space<vmem>>, %arg18: memref<10x32xf32, #tpu.memory_space<vmem>>, %arg19: memref<!tpu.dma_semaphore, #tpu.memory_space<semaphore_mem>>) attributes {dimension_semantics = [#tpu.dimension_semantics<arbitrary>], iteration_bounds = array<i64: 2>, scalar_prefetch = 0 : i64, scratch_operands = 1 : i64, tpu.core_type = #tpu.core_type<tc>, window_params = [{}, {pipeline_mode = #tpu.pipeline_mode<synchronous>, transform_indices = @transform_1, window_bounds = array<i64: 10, 1>}, {pipeline_mode = #tpu.pipeline_mode<synchronous>, transform_indices = @transform_2, window_bounds = array<i64: 1, 10>}, {transform_indices = @transform_3, window_bounds = array<i64: 1, 1, 32>}, {transform_indices = @transform_4, window_bounds = array<i64: 1, 1, 32>}, {transform_indices = @transform_5, window_bounds = array<i64: 1, 32, 96>}, {transform_indices = @transform_6, window_bounds = array<i64: 1, 1, 96>}, {transform_indices = @transform_7, window_bounds = array<i64: 1, 32, 32>}, {transform_indices = @transform_8, window_bounds = array<i64: 1, 1, 32>}, {transform_indices = @transform_9, window_bounds = array<i64: 1, 1, 32>}, {transform_indices = @transform_10, window_bounds = array<i64: 1, 1, 32>}, {transform_indices = @transform_11, window_bounds = array<i64: 1, 32, 128>}, {transform_indices = @transform_12, window_bounds = array<i64: 1, 1, 128>}, {transform_indices = @transform_13, window_bounds = array<i64: 1, 128, 32>}, {transform_indices = @transform_14, window_bounds = array<i64: 1, 1, 32>}, {pipeline_mode = #tpu.pipeline_mode<synchronous>, transform_indices = @transform_15, window_bounds = array<i64: 1, 32>}, {pipeline_mode = #tpu.pipeline_mode<synchronous>, transform_indices = @transform_16, window_bounds = array<i64: 1, 32>}, {pipeline_mode = #tpu.pipeline_mode<synchronous>, transform_indices = @transform_17, window_bounds = array<i64: 10, 32>}]} {
    %c0_i32 = arith.constant 0 : i32
    %0 = arith.cmpi eq, %arg0, %c0_i32 : i32
    %1 = arith.extui %0 : i1 to i32
    %c0_i32_0 = arith.constant 0 : i32
    %2 = arith.cmpi ne, %1, %c0_i32_0 : i32
    scf.if %2 {
      tpu.enqueue_dma source(%arg1 : memref<10x32xf32, #tpu.memory_space<any>>) target(%arg18 : memref<10x32xf32, #tpu.memory_space<vmem>>) target_semaphore(%arg19 : memref<!tpu.dma_semaphore, #tpu.memory_space<semaphore_mem>>)
      tpu.wait_dma2 semaphore(%arg19 : memref<!tpu.dma_semaphore, #tpu.memory_space<semaphore_mem>>) src(%arg1 : memref<10x32xf32, #tpu.memory_space<any>>) dst(%arg18 : memref<10x32xf32, #tpu.memory_space<vmem>>)
    } else {
    }
    %c0 = arith.constant 0 : index
    %c0_1 = arith.constant 0 : index
    %3 = vector.load %arg18[%c0, %c0_1] : memref<10x32xf32, #tpu.memory_space<vmem>>, vector<10x32xf32>
    %c0_2 = arith.constant 0 : index
    %c0_3 = arith.constant 0 : index
    %4 = vector.load %arg2[%c0_2, %c0_3] : memref<10x1xi32, #tpu.memory_space<vmem>>, vector<10x1xi32>
    %c0_4 = arith.constant 0 : index
    %c0_5 = arith.constant 0 : index
    %5 = vector.load %arg3[%c0_4, %c0_5] : memref<1x10xi32, #tpu.memory_space<vmem>>, vector<1x10xi32>
    %6 = vector.broadcast %4 : vector<10x1xi32> to vector<10x10xi32>
    %7 = vector.broadcast %5 : vector<1x10xi32> to vector<10x10xi32>
    %8 = arith.cmpi eq, %6, %7 : vector<10x10xi32>
    %c0_6 = arith.constant 0 : index
    %c0_7 = arith.constant 0 : index
    %c0_8 = arith.constant 0 : index
    %9 = vector.load %arg4[%c0_6, %c0_7, %c0_8] : memref<1x1x32xf32, #tpu.memory_space<vmem>>, vector<1x1x32xf32>
    %10 = vector.shape_cast %9 : vector<1x1x32xf32> to vector<1x32xf32>
    %c0_9 = arith.constant 0 : index
    %c0_10 = arith.constant 0 : index
    %c0_11 = arith.constant 0 : index
    %11 = vector.load %arg5[%c0_9, %c0_10, %c0_11] : memref<1x1x32xf32, #tpu.memory_space<vmem>>, vector<1x1x32xf32>
    %12 = vector.shape_cast %11 : vector<1x1x32xf32> to vector<1x32xf32>
    %cst = arith.constant dense<0.000000e+00> : vector<10xf32>
    %13 = vector.multi_reduction <add>, %3, %cst [1] : vector<10x32xf32> to vector<10xf32>
    %14 = vector.shape_cast %13 : vector<10xf32> to vector<10x1xf32>
    %cst_12 = arith.constant 3.200000e+01 : f32
    %15 = vector.broadcast %cst_12 : f32 to vector<10x1xf32>
    %16 = arith.divf %14, %15 : vector<10x1xf32>
    %17 = vector.broadcast %16 : vector<10x1xf32> to vector<10x32xf32>
    %18 = arith.subf %3, %17 : vector<10x32xf32>
    %19 = arith.mulf %18, %18 : vector<10x32xf32>
    %cst_13 = arith.constant dense<0.000000e+00> : vector<10xf32>
    %20 = vector.multi_reduction <add>, %19, %cst_13 [1] : vector<10x32xf32> to vector<10xf32>
    %21 = vector.shape_cast %20 : vector<10xf32> to vector<10x1xf32>
    %cst_14 = arith.constant 3.200000e+01 : f32
    %22 = vector.broadcast %cst_14 : f32 to vector<10x1xf32>
    %23 = arith.divf %21, %22 : vector<10x1xf32>
    %cst_15 = arith.constant 9.99999997E-7 : f32
    %24 = vector.broadcast %cst_15 : f32 to vector<10x1xf32>
    %25 = arith.addf %23, %24 : vector<10x1xf32>
    %26 = math.rsqrt %25 : vector<10x1xf32>
    %27 = vector.broadcast %26 : vector<10x1xf32> to vector<10x32xf32>
    %28 = arith.mulf %18, %27 : vector<10x32xf32>
    %29 = vector.broadcast %10 : vector<1x32xf32> to vector<10x32xf32>
    %30 = arith.mulf %28, %29 : vector<10x32xf32>
    %31 = vector.broadcast %12 : vector<1x32xf32> to vector<10x32xf32>
    %32 = arith.addf %30, %31 : vector<10x32xf32>
    %33 = arith.truncf %32 : vector<10x32xf32> to vector<10x32xbf16>
    %c0_16 = arith.constant 0 : index
    %c0_17 = arith.constant 0 : index
    %c0_18 = arith.constant 0 : index
    %34 = vector.load %arg6[%c0_16, %c0_17, %c0_18] : memref<1x32x96xbf16, #tpu.memory_space<vmem>>, vector<1x32x96xbf16>
    %35 = vector.shape_cast %34 : vector<1x32x96xbf16> to vector<32x96xbf16>
    %cst_19 = arith.constant dense<0.000000e+00> : vector<10x96xf32>
    %36 = tpu.matmul %33, %35, %cst_19 {dimension_numbers = #tpu.dot_dimension_numbers<[1], [0], [0], [1], [0, 0, 1, 1], [], []>} : vector<10x32xbf16>, vector<32x96xbf16>, vector<10x96xf32> -> vector<10x96xf32>
    %c0_20 = arith.constant 0 : index
    %c0_21 = arith.constant 0 : index
    %c0_22 = arith.constant 0 : index
    %37 = vector.load %arg7[%c0_20, %c0_21, %c0_22] : memref<1x1x96xf32, #tpu.memory_space<vmem>>, vector<1x1x96xf32>
    %38 = vector.shape_cast %37 : vector<1x1x96xf32> to vector<1x96xf32>
    %39 = vector.broadcast %38 : vector<1x96xf32> to vector<10x96xf32>
    %40 = arith.addf %36, %39 : vector<10x96xf32>
    %41 = vector.extract_strided_slice %40 {offsets = [0, 0], sizes = [10, 8], strides = [1, 1]} : vector<10x96xf32> to vector<10x8xf32>
    %42 = arith.truncf %41 : vector<10x8xf32> to vector<10x8xbf16>
    %43 = vector.extract_strided_slice %40 {offsets = [0, 32], sizes = [10, 8], strides = [1, 1]} : vector<10x96xf32> to vector<10x8xf32>
    %44 = arith.truncf %43 : vector<10x8xf32> to vector<10x8xbf16>
    %45 = vector.extract_strided_slice %40 {offsets = [0, 64], sizes = [10, 8], strides = [1, 1]} : vector<10x96xf32> to vector<10x8xf32>
    %46 = arith.truncf %45 : vector<10x8xf32> to vector<10x8xbf16>
    %cst_23 = arith.constant dense<0.000000e+00> : vector<10x10xf32>
    %47 = tpu.matmul %42, %44, %cst_23 {dimension_numbers = #tpu.dot_dimension_numbers<[1], [1], [0], [0], [0, 0, 1, 0], [], []>} : vector<10x8xbf16>, vector<10x8xbf16>, vector<10x10xf32> -> vector<10x10xf32>
    %cst_24 = arith.constant 0.353553385 : f32
    %48 = vector.broadcast %cst_24 : f32 to vector<10x10xf32>
    %49 = arith.mulf %47, %48 : vector<10x10xf32>
    %cst_25 = arith.constant -1.000000e+30 : f32
    %50 = vector.broadcast %cst_25 : f32 to vector<10x10xf32>
    %51 = arith.select %8, %49, %50 : vector<10x10xi1>, vector<10x10xf32>
    %cst_26 = arith.constant dense<0xFF800000> : vector<10xf32>
    %52 = vector.multi_reduction <maximumf>, %51, %cst_26 [1] : vector<10x10xf32> to vector<10xf32>
    %53 = vector.shape_cast %52 : vector<10xf32> to vector<10x1xf32>
    %54 = vector.broadcast %53 : vector<10x1xf32> to vector<10x10xf32>
    %55 = arith.subf %51, %54 : vector<10x10xf32>
    %56 = math.exp %55 : vector<10x10xf32>
    %cst_27 = arith.constant dense<0.000000e+00> : vector<10xf32>
    %57 = vector.multi_reduction <add>, %56, %cst_27 [1] : vector<10x10xf32> to vector<10xf32>
    %58 = vector.shape_cast %57 : vector<10xf32> to vector<10x1xf32>
    %59 = tpu.reciprocal %58 {approx = true} : vector<10x1xf32> -> vector<10x1xf32>
    %60 = vector.broadcast %59 : vector<10x1xf32> to vector<10x10xf32>
    %61 = arith.mulf %56, %60 : vector<10x10xf32>
    %62 = arith.truncf %61 : vector<10x10xf32> to vector<10x10xbf16>
    %cst_28 = arith.constant dense<0.000000e+00> : vector<10x8xf32>
    %63 = tpu.matmul %62, %46, %cst_28 {dimension_numbers = #tpu.dot_dimension_numbers<[1], [0], [0], [1], [0, 0, 1, 1], [], []>} : vector<10x10xbf16>, vector<10x8xbf16>, vector<10x8xf32> -> vector<10x8xf32>
    %64 = vector.extract_strided_slice %40 {offsets = [0, 8], sizes = [10, 8], strides = [1, 1]} : vector<10x96xf32> to vector<10x8xf32>
    %65 = arith.truncf %64 : vector<10x8xf32> to vector<10x8xbf16>
    %66 = vector.extract_strided_slice %40 {offsets = [0, 40], sizes = [10, 8], strides = [1, 1]} : vector<10x96xf32> to vector<10x8xf32>
    %67 = arith.truncf %66 : vector<10x8xf32> to vector<10x8xbf16>
    %68 = vector.extract_strided_slice %40 {offsets = [0, 72], sizes = [10, 8], strides = [1, 1]} : vector<10x96xf32> to vector<10x8xf32>
    %69 = arith.truncf %68 : vector<10x8xf32> to vector<10x8xbf16>
    %cst_29 = arith.constant dense<0.000000e+00> : vector<10x10xf32>
    %70 = tpu.matmul %65, %67, %cst_29 {dimension_numbers = #tpu.dot_dimension_numbers<[1], [1], [0], [0], [0, 0, 1, 0], [], []>} : vector<10x8xbf16>, vector<10x8xbf16>, vector<10x10xf32> -> vector<10x10xf32>
    %cst_30 = arith.constant 0.353553385 : f32
    %71 = vector.broadcast %cst_30 : f32 to vector<10x10xf32>
    %72 = arith.mulf %70, %71 : vector<10x10xf32>
    %cst_31 = arith.constant -1.000000e+30 : f32
    %73 = vector.broadcast %cst_31 : f32 to vector<10x10xf32>
    %74 = arith.select %8, %72, %73 : vector<10x10xi1>, vector<10x10xf32>
    %cst_32 = arith.constant dense<0xFF800000> : vector<10xf32>
    %75 = vector.multi_reduction <maximumf>, %74, %cst_32 [1] : vector<10x10xf32> to vector<10xf32>
    %76 = vector.shape_cast %75 : vector<10xf32> to vector<10x1xf32>
    %77 = vector.broadcast %76 : vector<10x1xf32> to vector<10x10xf32>
    %78 = arith.subf %74, %77 : vector<10x10xf32>
    %79 = math.exp %78 : vector<10x10xf32>
    %cst_33 = arith.constant dense<0.000000e+00> : vector<10xf32>
    %80 = vector.multi_reduction <add>, %79, %cst_33 [1] : vector<10x10xf32> to vector<10xf32>
    %81 = vector.shape_cast %80 : vector<10xf32> to vector<10x1xf32>
    %82 = tpu.reciprocal %81 {approx = true} : vector<10x1xf32> -> vector<10x1xf32>
    %83 = vector.broadcast %82 : vector<10x1xf32> to vector<10x10xf32>
    %84 = arith.mulf %79, %83 : vector<10x10xf32>
    %85 = arith.truncf %84 : vector<10x10xf32> to vector<10x10xbf16>
    %cst_34 = arith.constant dense<0.000000e+00> : vector<10x8xf32>
    %86 = tpu.matmul %85, %69, %cst_34 {dimension_numbers = #tpu.dot_dimension_numbers<[1], [0], [0], [1], [0, 0, 1, 1], [], []>} : vector<10x10xbf16>, vector<10x8xbf16>, vector<10x8xf32> -> vector<10x8xf32>
    %87 = vector.extract_strided_slice %40 {offsets = [0, 16], sizes = [10, 8], strides = [1, 1]} : vector<10x96xf32> to vector<10x8xf32>
    %88 = arith.truncf %87 : vector<10x8xf32> to vector<10x8xbf16>
    %89 = vector.extract_strided_slice %40 {offsets = [0, 48], sizes = [10, 8], strides = [1, 1]} : vector<10x96xf32> to vector<10x8xf32>
    %90 = arith.truncf %89 : vector<10x8xf32> to vector<10x8xbf16>
    %91 = vector.extract_strided_slice %40 {offsets = [0, 80], sizes = [10, 8], strides = [1, 1]} : vector<10x96xf32> to vector<10x8xf32>
    %92 = arith.truncf %91 : vector<10x8xf32> to vector<10x8xbf16>
    %cst_35 = arith.constant dense<0.000000e+00> : vector<10x10xf32>
    %93 = tpu.matmul %88, %90, %cst_35 {dimension_numbers = #tpu.dot_dimension_numbers<[1], [1], [0], [0], [0, 0, 1, 0], [], []>} : vector<10x8xbf16>, vector<10x8xbf16>, vector<10x10xf32> -> vector<10x10xf32>
    %cst_36 = arith.constant 0.353553385 : f32
    %94 = vector.broadcast %cst_36 : f32 to vector<10x10xf32>
    %95 = arith.mulf %93, %94 : vector<10x10xf32>
    %cst_37 = arith.constant -1.000000e+30 : f32
    %96 = vector.broadcast %cst_37 : f32 to vector<10x10xf32>
    %97 = arith.select %8, %95, %96 : vector<10x10xi1>, vector<10x10xf32>
    %cst_38 = arith.constant dense<0xFF800000> : vector<10xf32>
    %98 = vector.multi_reduction <maximumf>, %97, %cst_38 [1] : vector<10x10xf32> to vector<10xf32>
    %99 = vector.shape_cast %98 : vector<10xf32> to vector<10x1xf32>
    %100 = vector.broadcast %99 : vector<10x1xf32> to vector<10x10xf32>
    %101 = arith.subf %97, %100 : vector<10x10xf32>
    %102 = math.exp %101 : vector<10x10xf32>
    %cst_39 = arith.constant dense<0.000000e+00> : vector<10xf32>
    %103 = vector.multi_reduction <add>, %102, %cst_39 [1] : vector<10x10xf32> to vector<10xf32>
    %104 = vector.shape_cast %103 : vector<10xf32> to vector<10x1xf32>
    %105 = tpu.reciprocal %104 {approx = true} : vector<10x1xf32> -> vector<10x1xf32>
    %106 = vector.broadcast %105 : vector<10x1xf32> to vector<10x10xf32>
    %107 = arith.mulf %102, %106 : vector<10x10xf32>
    %108 = arith.truncf %107 : vector<10x10xf32> to vector<10x10xbf16>
    %cst_40 = arith.constant dense<0.000000e+00> : vector<10x8xf32>
    %109 = tpu.matmul %108, %92, %cst_40 {dimension_numbers = #tpu.dot_dimension_numbers<[1], [0], [0], [1], [0, 0, 1, 1], [], []>} : vector<10x10xbf16>, vector<10x8xbf16>, vector<10x8xf32> -> vector<10x8xf32>
    %110 = vector.extract_strided_slice %40 {offsets = [0, 24], sizes = [10, 8], strides = [1, 1]} : vector<10x96xf32> to vector<10x8xf32>
    %111 = arith.truncf %110 : vector<10x8xf32> to vector<10x8xbf16>
    %112 = vector.extract_strided_slice %40 {offsets = [0, 56], sizes = [10, 8], strides = [1, 1]} : vector<10x96xf32> to vector<10x8xf32>
    %113 = arith.truncf %112 : vector<10x8xf32> to vector<10x8xbf16>
    %114 = vector.extract_strided_slice %40 {offsets = [0, 88], sizes = [10, 8], strides = [1, 1]} : vector<10x96xf32> to vector<10x8xf32>
    %115 = arith.truncf %114 : vector<10x8xf32> to vector<10x8xbf16>
    %cst_41 = arith.constant dense<0.000000e+00> : vector<10x10xf32>
    %116 = tpu.matmul %111, %113, %cst_41 {dimension_numbers = #tpu.dot_dimension_numbers<[1], [1], [0], [0], [0, 0, 1, 0], [], []>} : vector<10x8xbf16>, vector<10x8xbf16>, vector<10x10xf32> -> vector<10x10xf32>
    %cst_42 = arith.constant 0.353553385 : f32
    %117 = vector.broadcast %cst_42 : f32 to vector<10x10xf32>
    %118 = arith.mulf %116, %117 : vector<10x10xf32>
    %cst_43 = arith.constant -1.000000e+30 : f32
    %119 = vector.broadcast %cst_43 : f32 to vector<10x10xf32>
    %120 = arith.select %8, %118, %119 : vector<10x10xi1>, vector<10x10xf32>
    %cst_44 = arith.constant dense<0xFF800000> : vector<10xf32>
    %121 = vector.multi_reduction <maximumf>, %120, %cst_44 [1] : vector<10x10xf32> to vector<10xf32>
    %122 = vector.shape_cast %121 : vector<10xf32> to vector<10x1xf32>
    %123 = vector.broadcast %122 : vector<10x1xf32> to vector<10x10xf32>
    %124 = arith.subf %120, %123 : vector<10x10xf32>
    %125 = math.exp %124 : vector<10x10xf32>
    %cst_45 = arith.constant dense<0.000000e+00> : vector<10xf32>
    %126 = vector.multi_reduction <add>, %125, %cst_45 [1] : vector<10x10xf32> to vector<10xf32>
    %127 = vector.shape_cast %126 : vector<10xf32> to vector<10x1xf32>
    %128 = tpu.reciprocal %127 {approx = true} : vector<10x1xf32> -> vector<10x1xf32>
    %129 = vector.broadcast %128 : vector<10x1xf32> to vector<10x10xf32>
    %130 = arith.mulf %125, %129 : vector<10x10xf32>
    %131 = arith.truncf %130 : vector<10x10xf32> to vector<10x10xbf16>
    %cst_46 = arith.constant dense<0.000000e+00> : vector<10x8xf32>
    %132 = tpu.matmul %131, %115, %cst_46 {dimension_numbers = #tpu.dot_dimension_numbers<[1], [0], [0], [1], [0, 0, 1, 1], [], []>} : vector<10x10xbf16>, vector<10x8xbf16>, vector<10x8xf32> -> vector<10x8xf32>
    %133 = tpu.concatenate %63, %86, %109, %132 in 1 : vector<10x8xf32>, vector<10x8xf32>, vector<10x8xf32>, vector<10x8xf32> -> vector<10x32xf32>
    %134 = arith.truncf %133 : vector<10x32xf32> to vector<10x32xbf16>
    %c0_47 = arith.constant 0 : index
    %c0_48 = arith.constant 0 : index
    %c0_49 = arith.constant 0 : index
    %135 = vector.load %arg8[%c0_47, %c0_48, %c0_49] : memref<1x32x32xbf16, #tpu.memory_space<vmem>>, vector<1x32x32xbf16>
    %136 = vector.shape_cast %135 : vector<1x32x32xbf16> to vector<32x32xbf16>
    %cst_50 = arith.constant dense<0.000000e+00> : vector<10x32xf32>
    %137 = tpu.matmul %134, %136, %cst_50 {dimension_numbers = #tpu.dot_dimension_numbers<[1], [0], [0], [1], [0, 0, 1, 1], [], []>} : vector<10x32xbf16>, vector<32x32xbf16>, vector<10x32xf32> -> vector<10x32xf32>
    %138 = arith.addf %3, %137 : vector<10x32xf32>
    %c0_51 = arith.constant 0 : index
    %c0_52 = arith.constant 0 : index
    %c0_53 = arith.constant 0 : index
    %139 = vector.load %arg9[%c0_51, %c0_52, %c0_53] : memref<1x1x32xf32, #tpu.memory_space<vmem>>, vector<1x1x32xf32>
    %140 = vector.shape_cast %139 : vector<1x1x32xf32> to vector<1x32xf32>
    %141 = vector.broadcast %140 : vector<1x32xf32> to vector<10x32xf32>
    %142 = arith.addf %138, %141 : vector<10x32xf32>
    %c0_54 = arith.constant 0 : index
    %c0_55 = arith.constant 0 : index
    %c0_56 = arith.constant 0 : index
    %143 = vector.load %arg10[%c0_54, %c0_55, %c0_56] : memref<1x1x32xf32, #tpu.memory_space<vmem>>, vector<1x1x32xf32>
    %144 = vector.shape_cast %143 : vector<1x1x32xf32> to vector<1x32xf32>
    %c0_57 = arith.constant 0 : index
    %c0_58 = arith.constant 0 : index
    %c0_59 = arith.constant 0 : index
    %145 = vector.load %arg11[%c0_57, %c0_58, %c0_59] : memref<1x1x32xf32, #tpu.memory_space<vmem>>, vector<1x1x32xf32>
    %146 = vector.shape_cast %145 : vector<1x1x32xf32> to vector<1x32xf32>
    %cst_60 = arith.constant dense<0.000000e+00> : vector<10xf32>
    %147 = vector.multi_reduction <add>, %142, %cst_60 [1] : vector<10x32xf32> to vector<10xf32>
    %148 = vector.shape_cast %147 : vector<10xf32> to vector<10x1xf32>
    %cst_61 = arith.constant 3.200000e+01 : f32
    %149 = vector.broadcast %cst_61 : f32 to vector<10x1xf32>
    %150 = arith.divf %148, %149 : vector<10x1xf32>
    %151 = vector.broadcast %150 : vector<10x1xf32> to vector<10x32xf32>
    %152 = arith.subf %142, %151 : vector<10x32xf32>
    %153 = arith.mulf %152, %152 : vector<10x32xf32>
    %cst_62 = arith.constant dense<0.000000e+00> : vector<10xf32>
    %154 = vector.multi_reduction <add>, %153, %cst_62 [1] : vector<10x32xf32> to vector<10xf32>
    %155 = vector.shape_cast %154 : vector<10xf32> to vector<10x1xf32>
    %cst_63 = arith.constant 3.200000e+01 : f32
    %156 = vector.broadcast %cst_63 : f32 to vector<10x1xf32>
    %157 = arith.divf %155, %156 : vector<10x1xf32>
    %cst_64 = arith.constant 9.99999997E-7 : f32
    %158 = vector.broadcast %cst_64 : f32 to vector<10x1xf32>
    %159 = arith.addf %157, %158 : vector<10x1xf32>
    %160 = math.rsqrt %159 : vector<10x1xf32>
    %161 = vector.broadcast %160 : vector<10x1xf32> to vector<10x32xf32>
    %162 = arith.mulf %152, %161 : vector<10x32xf32>
    %163 = vector.broadcast %144 : vector<1x32xf32> to vector<10x32xf32>
    %164 = arith.mulf %162, %163 : vector<10x32xf32>
    %165 = vector.broadcast %146 : vector<1x32xf32> to vector<10x32xf32>
    %166 = arith.addf %164, %165 : vector<10x32xf32>
    %167 = arith.truncf %166 : vector<10x32xf32> to vector<10x32xbf16>
    %c0_65 = arith.constant 0 : index
    %c0_66 = arith.constant 0 : index
    %c0_67 = arith.constant 0 : index
    %168 = vector.load %arg12[%c0_65, %c0_66, %c0_67] : memref<1x32x128xbf16, #tpu.memory_space<vmem>>, vector<1x32x128xbf16>
    %169 = vector.shape_cast %168 : vector<1x32x128xbf16> to vector<32x128xbf16>
    %cst_68 = arith.constant dense<0.000000e+00> : vector<10x128xf32>
    %170 = tpu.matmul %167, %169, %cst_68 {dimension_numbers = #tpu.dot_dimension_numbers<[1], [0], [0], [1], [0, 0, 1, 1], [], []>} : vector<10x32xbf16>, vector<32x128xbf16>, vector<10x128xf32> -> vector<10x128xf32>
    %c0_69 = arith.constant 0 : index
    %c0_70 = arith.constant 0 : index
    %c0_71 = arith.constant 0 : index
    %171 = vector.load %arg13[%c0_69, %c0_70, %c0_71] : memref<1x1x128xf32, #tpu.memory_space<vmem>>, vector<1x1x128xf32>
    %172 = vector.shape_cast %171 : vector<1x1x128xf32> to vector<1x128xf32>
    %173 = vector.broadcast %172 : vector<1x128xf32> to vector<10x128xf32>
    %174 = arith.addf %170, %173 : vector<10x128xf32>
    %cst_72 = arith.constant 5.000000e-01 : f32
    %175 = vector.broadcast %cst_72 : f32 to vector<10x128xf32>
    %176 = arith.mulf %175, %174 : vector<10x128xf32>
    %cst_73 = arith.constant 4.471500e-02 : f32
    %177 = vector.broadcast %cst_73 : f32 to vector<10x128xf32>
    %178 = arith.mulf %177, %174 : vector<10x128xf32>
    %179 = arith.mulf %178, %174 : vector<10x128xf32>
    %180 = arith.mulf %179, %174 : vector<10x128xf32>
    %181 = arith.addf %174, %180 : vector<10x128xf32>
    %cst_74 = arith.constant 0.797884583 : f32
    %182 = vector.broadcast %cst_74 : f32 to vector<10x128xf32>
    %183 = arith.mulf %182, %181 : vector<10x128xf32>
    %184 = math.tanh %183 : vector<10x128xf32>
    %cst_75 = arith.constant 1.000000e+00 : f32
    %185 = vector.broadcast %cst_75 : f32 to vector<10x128xf32>
    %186 = arith.addf %185, %184 : vector<10x128xf32>
    %187 = arith.mulf %176, %186 : vector<10x128xf32>
    %188 = arith.truncf %187 : vector<10x128xf32> to vector<10x128xbf16>
    %c0_76 = arith.constant 0 : index
    %c0_77 = arith.constant 0 : index
    %c0_78 = arith.constant 0 : index
    %189 = vector.load %arg14[%c0_76, %c0_77, %c0_78] : memref<1x128x32xbf16, #tpu.memory_space<vmem>>, vector<1x128x32xbf16>
    %190 = vector.shape_cast %189 : vector<1x128x32xbf16> to vector<128x32xbf16>
    %cst_79 = arith.constant dense<0.000000e+00> : vector<10x32xf32>
    %191 = tpu.matmul %188, %190, %cst_79 {dimension_numbers = #tpu.dot_dimension_numbers<[1], [0], [0], [1], [0, 0, 1, 1], [], []>} : vector<10x128xbf16>, vector<128x32xbf16>, vector<10x32xf32> -> vector<10x32xf32>
    %192 = arith.addf %142, %191 : vector<10x32xf32>
    %c0_80 = arith.constant 0 : index
    %c0_81 = arith.constant 0 : index
    %c0_82 = arith.constant 0 : index
    %193 = vector.load %arg15[%c0_80, %c0_81, %c0_82] : memref<1x1x32xf32, #tpu.memory_space<vmem>>, vector<1x1x32xf32>
    %194 = vector.shape_cast %193 : vector<1x1x32xf32> to vector<1x32xf32>
    %195 = vector.broadcast %194 : vector<1x32xf32> to vector<10x32xf32>
    %196 = arith.addf %192, %195 : vector<10x32xf32>
    %c1_i32 = arith.constant 1 : i32
    %197 = arith.cmpi slt, %arg0, %c1_i32 : i32
    %198 = arith.extui %197 : i1 to i32
    %c0_i32_83 = arith.constant 0 : i32
    %199 = arith.cmpi ne, %198, %c0_i32_83 : i32
    scf.if %199 {
      %c0_86 = arith.constant 0 : index
      %c0_87 = arith.constant 0 : index
      %203 = vector.load %arg18[%c0_86, %c0_87] : memref<10x32xf32, #tpu.memory_space<vmem>>, vector<10x32xf32>
      tpu.vector_store %arg18[%c0_86, %c0_87], %196 {strides = array<i32>} : memref<10x32xf32, #tpu.memory_space<vmem>>, vector<10x32xf32>,
    } else {
    }
    %c1_i32_84 = arith.constant 1 : i32
    %200 = arith.cmpi eq, %arg0, %c1_i32_84 : i32
    %201 = arith.extui %200 : i1 to i32
    %c0_i32_85 = arith.constant 0 : i32
    %202 = arith.cmpi ne, %201, %c0_i32_85 : i32
    scf.if %202 {
      %c0_86 = arith.constant 0 : index
      %c0_87 = arith.constant 0 : index
      %203 = vector.load %arg16[%c0_86, %c0_87] : memref<1x32xf32, #tpu.memory_space<vmem>>, vector<1x32xf32>
      %c0_88 = arith.constant 0 : index
      %c0_89 = arith.constant 0 : index
      %204 = vector.load %arg17[%c0_88, %c0_89] : memref<1x32xf32, #tpu.memory_space<vmem>>, vector<1x32xf32>
      %cst_90 = arith.constant dense<0.000000e+00> : vector<10xf32>
      %205 = vector.multi_reduction <add>, %196, %cst_90 [1] : vector<10x32xf32> to vector<10xf32>
      %206 = vector.shape_cast %205 : vector<10xf32> to vector<10x1xf32>
      %cst_91 = arith.constant 3.200000e+01 : f32
      %207 = vector.broadcast %cst_91 : f32 to vector<10x1xf32>
      %208 = arith.divf %206, %207 : vector<10x1xf32>
      %209 = vector.broadcast %208 : vector<10x1xf32> to vector<10x32xf32>
      %210 = arith.subf %196, %209 : vector<10x32xf32>
      %211 = arith.mulf %210, %210 : vector<10x32xf32>
      %cst_92 = arith.constant dense<0.000000e+00> : vector<10xf32>
      %212 = vector.multi_reduction <add>, %211, %cst_92 [1] : vector<10x32xf32> to vector<10xf32>
      %213 = vector.shape_cast %212 : vector<10xf32> to vector<10x1xf32>
      %cst_93 = arith.constant 3.200000e+01 : f32
      %214 = vector.broadcast %cst_93 : f32 to vector<10x1xf32>
      %215 = arith.divf %213, %214 : vector<10x1xf32>
      %cst_94 = arith.constant 9.99999997E-7 : f32
      %216 = vector.broadcast %cst_94 : f32 to vector<10x1xf32>
      %217 = arith.addf %215, %216 : vector<10x1xf32>
      %218 = math.rsqrt %217 : vector<10x1xf32>
      %219 = vector.broadcast %218 : vector<10x1xf32> to vector<10x32xf32>
      %220 = arith.mulf %210, %219 : vector<10x32xf32>
      %221 = vector.broadcast %203 : vector<1x32xf32> to vector<10x32xf32>
      %222 = arith.mulf %220, %221 : vector<10x32xf32>
      %223 = vector.broadcast %204 : vector<1x32xf32> to vector<10x32xf32>
      %224 = arith.addf %222, %223 : vector<10x32xf32>
      %c0_95 = arith.constant 0 : index
      %c0_96 = arith.constant 0 : index
      %225 = vector.load %arg18[%c0_95, %c0_96] : memref<10x32xf32, #tpu.memory_space<vmem>>, vector<10x32xf32>
      tpu.vector_store %arg18[%c0_95, %c0_96], %224 {strides = array<i32>} : memref<10x32xf32, #tpu.memory_space<vmem>>, vector<10x32xf32>,
    } else {
    }
    return
  }
  func.func @transform_1(%arg0: i32) -> (i32, i32) {
    %c0_i32 = arith.constant 0 : i32
    %c0_i32_0 = arith.constant 0 : i32
    %c0_i32_1 = arith.constant 0 : i32
    return %c0_i32, %c0_i32_0 : i32, i32
  }
  func.func @transform_2(%arg0: i32) -> (i32, i32) {
    %c0_i32 = arith.constant 0 : i32
    %c0_i32_0 = arith.constant 0 : i32
    %c0_i32_1 = arith.constant 0 : i32
    return %c0_i32, %c0_i32_0 : i32, i32
  }
  func.func @transform_3(%arg0: i32) -> (i32, i32, i32) {
    %c0_i32 = arith.constant 0 : i32
    %c0_i32_0 = arith.constant 0 : i32
    %c0_i32_1 = arith.constant 0 : i32
    return %arg0, %c0_i32, %c0_i32_0 : i32, i32, i32
  }
  func.func @transform_4(%arg0: i32) -> (i32, i32, i32) {
    %c0_i32 = arith.constant 0 : i32
    %c0_i32_0 = arith.constant 0 : i32
    %c0_i32_1 = arith.constant 0 : i32
    return %arg0, %c0_i32, %c0_i32_0 : i32, i32, i32
  }
  func.func @transform_5(%arg0: i32) -> (i32, i32, i32) {
    %c0_i32 = arith.constant 0 : i32
    %c0_i32_0 = arith.constant 0 : i32
    %c0_i32_1 = arith.constant 0 : i32
    return %arg0, %c0_i32, %c0_i32_0 : i32, i32, i32
  }
  func.func @transform_6(%arg0: i32) -> (i32, i32, i32) {
    %c0_i32 = arith.constant 0 : i32
    %c0_i32_0 = arith.constant 0 : i32
    %c0_i32_1 = arith.constant 0 : i32
    return %arg0, %c0_i32, %c0_i32_0 : i32, i32, i32
  }
  func.func @transform_7(%arg0: i32) -> (i32, i32, i32) {
    %c0_i32 = arith.constant 0 : i32
    %c0_i32_0 = arith.constant 0 : i32
    %c0_i32_1 = arith.constant 0 : i32
    return %arg0, %c0_i32, %c0_i32_0 : i32, i32, i32
  }
  func.func @transform_8(%arg0: i32) -> (i32, i32, i32) {
    %c0_i32 = arith.constant 0 : i32
    %c0_i32_0 = arith.constant 0 : i32
    %c0_i32_1 = arith.constant 0 : i32
    return %arg0, %c0_i32, %c0_i32_0 : i32, i32, i32
  }
  func.func @transform_9(%arg0: i32) -> (i32, i32, i32) {
    %c0_i32 = arith.constant 0 : i32
    %c0_i32_0 = arith.constant 0 : i32
    %c0_i32_1 = arith.constant 0 : i32
    return %arg0, %c0_i32, %c0_i32_0 : i32, i32, i32
  }
  func.func @transform_10(%arg0: i32) -> (i32, i32, i32) {
    %c0_i32 = arith.constant 0 : i32
    %c0_i32_0 = arith.constant 0 : i32
    %c0_i32_1 = arith.constant 0 : i32
    return %arg0, %c0_i32, %c0_i32_0 : i32, i32, i32
  }
  func.func @transform_11(%arg0: i32) -> (i32, i32, i32) {
    %c0_i32 = arith.constant 0 : i32
    %c0_i32_0 = arith.constant 0 : i32
    %c0_i32_1 = arith.constant 0 : i32
    return %arg0, %c0_i32, %c0_i32_0 : i32, i32, i32
  }
  func.func @transform_12(%arg0: i32) -> (i32, i32, i32) {
    %c0_i32 = arith.constant 0 : i32
    %c0_i32_0 = arith.constant 0 : i32
    %c0_i32_1 = arith.constant 0 : i32
    return %arg0, %c0_i32, %c0_i32_0 : i32, i32, i32
  }
  func.func @transform_13(%arg0: i32) -> (i32, i32, i32) {
    %c0_i32 = arith.constant 0 : i32
    %c0_i32_0 = arith.constant 0 : i32
    %c0_i32_1 = arith.constant 0 : i32
    return %arg0, %c0_i32, %c0_i32_0 : i32, i32, i32
  }
  func.func @transform_14(%arg0: i32) -> (i32, i32, i32) {
    %c0_i32 = arith.constant 0 : i32
    %c0_i32_0 = arith.constant 0 : i32
    %c0_i32_1 = arith.constant 0 : i32
    return %arg0, %c0_i32, %c0_i32_0 : i32, i32, i32
  }
  func.func @transform_15(%arg0: i32) -> (i32, i32) {
    %c0_i32 = arith.constant 0 : i32
    %c0_i32_0 = arith.constant 0 : i32
    %c0_i32_1 = arith.constant 0 : i32
    return %c0_i32, %c0_i32_0 : i32, i32
  }
  func.func @transform_16(%arg0: i32) -> (i32, i32) {
    %c0_i32 = arith.constant 0 : i32
    %c0_i32_0 = arith.constant 0 : i32
    %c0_i32_1 = arith.constant 0 : i32
    return %c0_i32, %c0_i32_0 : i32, i32
  }
  func.func @transform_17(%arg0: i32) -> (i32, i32) {
    %c0_i32 = arith.constant 0 : i32
    %c0_i32_0 = arith.constant 0 : i32
    %c0_i32_1 = arith.constant 0 : i32
    return %c0_i32, %c0_i32_0 : i32, i32
  }
}

</mosaic_0001>

<llo_original>
// kernel: sapiens_wrapper_forward.2
$region0: #{sapiens_wrapper_forward.2}
  #allocation0 [shape = 'u32[]', space=smem, size = 0x4, offset = 0x4, fixed_abs, tag = 'smem constant byte address 0x4 - core index']
  #allocation1 [shape = 'u32[144,128]{1,0:T(1,128)}', space=vmem, size = 0x12000, scoped, tag = 'internal scratch']
  %s0 = inlined_call_operand.vmem [shape: bf16[8,768], index: 0, kind: input, shape index: {}]
  %s1 = inlined_call_operand.vmem [shape: bf16[768,32], index: 1, kind: input, shape index: {}]
  %s2 = inlined_call_operand.vmem [shape: f32[1,32], index: 2, kind: input, shape index: {}]
  %s3 = inlined_call_operand.vmem [shape: f32[10,32], index: 3, kind: input, shape index: {}]
  %s4 = inlined_call_operand.vmem [shape: f32[10,32], index: 4, kind: output, shape index: {}]
  %s5 = sld [smem:[#allocation0]]
  $region26: #{sapiens_wrapper_forward.2} parent=0
    _
  %s7 = ssub.s32 1, %s5
  %s8 = scalar_select 0, %s7, %s5
  // Predicated region
  $region2: #{sapiens_wrapper_forward.2} parent=0 // pred_check
    _
  $region3: #{sapiens_wrapper_forward.2} parent=0 // pred_check_branch
    %10 = sbr.rel (0) target = $region5
  $region4: #{sapiens_wrapper_forward.2} parent=0 // pred_region
    _
  $region5: #{sapiens_wrapper_forward.2} parent=0 // pred_fallthru
    _
  // Predicated region
  $region6: #{sapiens_wrapper_forward.2} parent=0 // pred_check
    _
  $region7: #{sapiens_wrapper_forward.2} parent=0 // pred_check_branch
    %12 = sbr.rel (0) target = $region9
  $region8: #{sapiens_wrapper_forward.2} parent=0 // pred_region
    _
  $region9: #{sapiens_wrapper_forward.2} parent=0 // pred_fallthru
    _
  // Predicated region
  $region10: #{sapiens_wrapper_forward.2} parent=0 // pred_check
    _
  $region11: #{sapiens_wrapper_forward.2} parent=0 // pred_check_branch
    %14 = sbr.rel (0) target = $region13
  $region12: #{sapiens_wrapper_forward.2} parent=0 // pred_region
    _
  $region13: #{sapiens_wrapper_forward.2} parent=0 // pred_fallthru
    _
  // Predicated region
  $region14: #{sapiens_wrapper_forward.2} parent=0 // pred_check
    _
  $region15: #{sapiens_wrapper_forward.2} parent=0 // pred_check_branch
    %16 = sbr.rel (0) target = $region17
  $region16: #{sapiens_wrapper_forward.2} parent=0 // pred_region
    _
  $region17: #{sapiens_wrapper_forward.2} parent=0 // pred_fallthru
    _
  %v18 = vld [vmem:[%s0] sm:$0xff]
  %v19 = vld [vmem:[%s0 + $0x8] sm:$0xff]
  %v20 = vld [vmem:[%s0 + $0x10] sm:$0xff]
  %v21 = vld [vmem:[%s1] sm:$0xf]
  %v22 = vld [vmem:[%s1 + $0x4] sm:$0xf]
  %v23 = vld [vmem:[%s1 + $0x8] sm:$0xf]
  %v24 = vld [vmem:[%s1 + $0xc] sm:$0xf]
  %v25 = vld [vmem:[%s1 + $0x10] sm:$0xf]
  %v26 = vld [vmem:[%s1 + $0x14] sm:$0xf]
  %v27 = vld [vmem:[%s1 + $0x18] sm:$0xf]
  %v28 = vld [vmem:[%s1 + $0x1c] sm:$0xf]
  %v29 = vld [vmem:[%s1 + $0x20] sm:$0xf]
  %v30 = vld [vmem:[%s1 + $0x24] sm:$0xf]
  %v31 = vld [vmem:[%s1 + $0x28] sm:$0xf]
  %v32 = vld [vmem:[%s1 + $0x2c] sm:$0xf]
  %v33 = vld [vmem:[%s1 + $0x30] sm:$0xf]
  %v34 = vld [vmem:[%s1 + $0x34] sm:$0xf]
  %v35 = vld [vmem:[%s1 + $0x38] sm:$0xf]
  %v36 = vld [vmem:[%s1 + $0x3c] sm:$0xf]
  %v37 = vld [vmem:[%s1 + $0x40] sm:$0xf]
  %v38 = vld [vmem:[%s1 + $0x44] sm:$0xf]
  %v39 = vld [vmem:[%s1 + $0x48] sm:$0xf]
  %v40 = vld [vmem:[%s1 + $0x4c] sm:$0xf]
  %v41 = vld [vmem:[%s1 + $0x50] sm:$0xf]
  %v42 = vld [vmem:[%s1 + $0x54] sm:$0xf]
  %v43 = vld [vmem:[%s1 + $0x58] sm:$0xf]
  %v44 = vld [vmem:[%s1 + $0x5c] sm:$0xf]
  %v45 = vld [vmem:[%s1 + $0x60] sm:$0xf]
  %v46 = vld [vmem:[%s1 + $0x64] sm:$0xf]
  %v47 = vld [vmem:[%s1 + $0x68] sm:$0xf]
  %v48 = vld [vmem:[%s1 + $0x6c] sm:$0xf]
  %v49 = vld [vmem:[%s1 + $0x70] sm:$0xf]
  %v50 = vld [vmem:[%s1 + $0x74] sm:$0xf]
  %v51 = vld [vmem:[%s1 + $0x78] sm:$0xf]
  %v52 = vld [vmem:[%s1 + $0x7c] sm:$0xf]
  %v53 = vld [vmem:[%s1 + $0x80] sm:$0xf]
  %v54 = vld [vmem:[%s1 + $0x84] sm:$0xf]
  %v55 = vld [vmem:[%s1 + $0x88] sm:$0xf]
  %v56 = vld [vmem:[%s1 + $0x8c] sm:$0xf]
  %v57 = vld [vmem:[%s1 + $0x90] sm:$0xf]
  %v58 = vld [vmem:[%s1 + $0x94] sm:$0xf]
  %v59 = vld [vmem:[%s1 + $0x98] sm:$0xf]
  %v60 = vld [vmem:[%s1 + $0x9c] sm:$0xf]
  %v61 = vld [vmem:[%s1 + $0xa0] sm:$0xf]
  %v62 = vld [vmem:[%s1 + $0xa4] sm:$0xf]
  %v63 = vld [vmem:[%s1 + $0xa8] sm:$0xf]
  %v64 = vld [vmem:[%s1 + $0xac] sm:$0xf]
  %v65 = vld [vmem:[%s1 + $0xb0] sm:$0xf]
  %v66 = vld [vmem:[%s1 + $0xb4] sm:$0xf]
  %v67 = vld [vmem:[%s1 + $0xb8] sm:$0xf]
  %v68 = vld [vmem:[%s1 + $0xbc] sm:$0xf]
  %v69 = vld [vmem:[%s1 + $0xc0] sm:$0xf]
  %v70 = vld [vmem:[%s1 + $0xc4] sm:$0xf]
  %v71 = vld [vmem:[%s1 + $0xc8] sm:$0xf]
  %v72 = vld [vmem:[%s1 + $0xcc] sm:$0xf]
  %v73 = vld [vmem:[%s1 + $0xd0] sm:$0xf]
  %v74 = vld [vmem:[%s1 + $0xd4] sm:$0xf]
  %v75 = vld [vmem:[%s1 + $0xd8] sm:$0xf]
  %v76 = vld [vmem:[%s1 + $0xdc] sm:$0xf]
  %v77 = vld [vmem:[%s1 + $0xe0] sm:$0xf]
  %v78 = vld [vmem:[%s1 + $0xe4] sm:$0xf]
  %v79 = vld [vmem:[%s1 + $0xe8] sm:$0xf]
  %v80 = vld [vmem:[%s1 + $0xec] sm:$0xf]
  %v81 = vld [vmem:[%s1 + $0xf0] sm:$0xf]
  %v82 = vld [vmem:[%s1 + $0xf4] sm:$0xf]
  %v83 = vld [vmem:[%s1 + $0xf8] sm:$0xf]
  %v84 = vld [vmem:[%s1 + $0xfc] sm:$0xf]
  %v85 = vld [vmem:[%s1 + $0x100] sm:$0xf]
  %v86 = vld [vmem:[%s1 + $0x104] sm:$0xf]
  %v87 = vld [vmem:[%s1 + $0x108] sm:$0xf]
  %v88 = vld [vmem:[%s1 + $0x10c] sm:$0xf]
  %v89 = vld [vmem:[%s1 + $0x110] sm:$0xf]
  %v90 = vld [vmem:[%s1 + $0x114] sm:$0xf]
  %v91 = vld [vmem:[%s1 + $0x118] sm:$0xf]
  %v92 = vld [vmem:[%s1 + $0x11c] sm:$0xf]
  %v93 = vld [vmem:[%s1 + $0x120] sm:$0xf]
  %v94 = vld [vmem:[%s1 + $0x124] sm:$0xf]
  %v95 = vld [vmem:[%s1 + $0x128] sm:$0xf]
  %v96 = vld [vmem:[%s1 + $0x12c] sm:$0xf]
  %v97 = vld [vmem:[%s1 + $0x130] sm:$0xf]
  %v98 = vld [vmem:[%s1 + $0x134] sm:$0xf]
  %v99 = vld [vmem:[%s1 + $0x138] sm:$0xf]
  %v100 = vld [vmem:[%s1 + $0x13c] sm:$0xf]
  %v101 = vld [vmem:[%s1 + $0x140] sm:$0xf]
  %v102 = vld [vmem:[%s1 + $0x144] sm:$0xf]
  %v103 = vld [vmem:[%s1 + $0x148] sm:$0xf]
  %v104 = vld [vmem:[%s1 + $0x14c] sm:$0xf]
  %v105 = vld [vmem:[%s1 + $0x150] sm:$0xf]
  %v106 = vld [vmem:[%s1 + $0x154] sm:$0xf]
  %v107 = vld [vmem:[%s1 + $0x158] sm:$0xf]
  %v108 = vld [vmem:[%s1 + $0x15c] sm:$0xf]
  %v109 = vld [vmem:[%s1 + $0x160] sm:$0xf]
  %v110 = vld [vmem:[%s1 + $0x164] sm:$0xf]
  %v111 = vld [vmem:[%s1 + $0x168] sm:$0xf]
  %v112 = vld [vmem:[%s1 + $0x16c] sm:$0xf]
  %v113 = vld [vmem:[%s1 + $0x170] sm:$0xf]
  %v114 = vld [vmem:[%s1 + $0x174] sm:$0xf]
  %v115 = vld [vmem:[%s1 + $0x178] sm:$0xf]
  %v116 = vld [vmem:[%s1 + $0x17c] sm:$0xf]
  %v117 = vld [vmem:[%s2] sm:$0x1]
  %v119 = vlaneseq
  %v120 = vshrl.u32 %v119, 7
  %v121 = vsub.s32 0, %v120
  %v122 = vrot.slane %v117, %v121
  %v127 = vunpack.c.l.b16 %v18
  %v128 = vunpack.c.h.b16 %v18
  %v129 = vunpack.c.l.b16 %v19
  %v130 = vunpack.c.h.b16 %v19
  %v131 = vunpack.c.l.b16 %v20
  %v132 = vunpack.c.h.b16 %v20
  %v133 = vpack.c.b16 %v127, %v127
  %v134 = vpack.c.b16 %v128, %v128
  %v135 = vpack.c.b16 %v129, %v129
  %v136 = vpack.c.b16 %v130, %v130
  %v137 = vpack.c.b16 %v131, %v131
  %v138 = vpack.c.b16 %v132, %v132
  %v241 = vunpack.c.l.b16 %v21
  %v242 = vunpack.c.l.b16 %v22
  %v243 = vunpack.c.l.b16 %v23
  %v244 = vunpack.c.l.b16 %v24
  %v245 = vunpack.c.l.b16 %v25
  %v246 = vunpack.c.l.b16 %v26
  %v247 = vunpack.c.l.b16 %v27
  %v248 = vunpack.c.l.b16 %v28
  %v249 = vunpack.c.l.b16 %v29
  %v250 = vunpack.c.l.b16 %v30
  %v251 = vunpack.c.l.b16 %v31
  %v252 = vunpack.c.l.b16 %v32
  %v253 = vunpack.c.l.b16 %v33
  %v254 = vunpack.c.l.b16 %v34
  %v255 = vunpack.c.l.b16 %v35
  %v256 = vunpack.c.l.b16 %v36
  %v257 = vunpack.c.l.b16 %v37
  %v258 = vunpack.c.l.b16 %v38
  %v259 = vunpack.c.l.b16 %v39
  %v260 = vunpack.c.l.b16 %v40
  %v261 = vunpack.c.l.b16 %v41
  %v262 = vunpack.c.l.b16 %v42
  %v263 = vunpack.c.l.b16 %v43
  %v264 = vunpack.c.l.b16 %v44
  %v265 = vunpack.c.l.b16 %v45
  %v266 = vunpack.c.l.b16 %v46
  %v267 = vunpack.c.l.b16 %v47
  %v268 = vunpack.c.l.b16 %v48
  %v269 = vunpack.c.l.b16 %v49
  %v270 = vunpack.c.l.b16 %v50
  %v271 = vunpack.c.l.b16 %v51
  %v272 = vunpack.c.l.b16 %v52
  %v273 = vunpack.c.l.b16 %v53
  %v274 = vunpack.c.l.b16 %v54
  %v275 = vunpack.c.l.b16 %v55
  %v276 = vunpack.c.l.b16 %v56
  %v277 = vunpack.c.l.b16 %v57
  %v278 = vunpack.c.l.b16 %v58
  %v279 = vunpack.c.l.b16 %v59
  %v280 = vunpack.c.l.b16 %v60
  %v281 = vunpack.c.l.b16 %v61
  %v282 = vunpack.c.l.b16 %v62
  %v283 = vunpack.c.l.b16 %v63
  %v284 = vunpack.c.l.b16 %v64
  %v285 = vunpack.c.l.b16 %v65
  %v286 = vunpack.c.l.b16 %v66
  %v287 = vunpack.c.l.b16 %v67
  %v288 = vunpack.c.l.b16 %v68
  %v289 = vunpack.c.l.b16 %v69
  %v290 = vunpack.c.l.b16 %v70
  %v291 = vunpack.c.l.b16 %v71
  %v292 = vunpack.c.l.b16 %v72
  %v293 = vunpack.c.l.b16 %v73
  %v294 = vunpack.c.l.b16 %v74
  %v295 = vunpack.c.l.b16 %v75
  %v296 = vunpack.c.l.b16 %v76
  %v297 = vunpack.c.l.b16 %v77
  %v298 = vunpack.c.l.b16 %v78
  %v299 = vunpack.c.l.b16 %v79
  %v300 = vunpack.c.l.b16 %v80
  %v301 = vunpack.c.l.b16 %v81
  %v302 = vunpack.c.l.b16 %v82
  %v303 = vunpack.c.l.b16 %v83
  %v304 = vunpack.c.l.b16 %v84
  %v305 = vunpack.c.l.b16 %v85
  %v306 = vunpack.c.l.b16 %v86
  %v307 = vunpack.c.l.b16 %v87
  %v308 = vunpack.c.l.b16 %v88
  %v309 = vunpack.c.l.b16 %v89
  %v310 = vunpack.c.l.b16 %v90
  %v311 = vunpack.c.l.b16 %v91
  %v312 = vunpack.c.l.b16 %v92
  %v313 = vunpack.c.l.b16 %v93
  %v314 = vunpack.c.l.b16 %v94
  %v315 = vunpack.c.l.b16 %v95
  %v316 = vunpack.c.l.b16 %v96
  %v317 = vunpack.c.l.b16 %v97
  %v318 = vunpack.c.l.b16 %v98
  %v319 = vunpack.c.l.b16 %v99
  %v320 = vunpack.c.l.b16 %v100
  %v321 = vunpack.c.l.b16 %v101
  %v322 = vunpack.c.l.b16 %v102
  %v323 = vunpack.c.l.b16 %v103
  %v324 = vunpack.c.l.b16 %v104
  %v325 = vunpack.c.l.b16 %v105
  %v326 = vunpack.c.l.b16 %v106
  %v327 = vunpack.c.l.b16 %v107
  %v328 = vunpack.c.l.b16 %v108
  %v329 = vunpack.c.l.b16 %v109
  %v330 = vunpack.c.l.b16 %v110
  %v331 = vunpack.c.l.b16 %v111
  %v332 = vunpack.c.l.b16 %v112
  %v333 = vunpack.c.l.b16 %v113
  %v334 = vunpack.c.l.b16 %v114
  %v335 = vunpack.c.l.b16 %v115
  %v336 = vunpack.c.l.b16 %v116
  %v337 = vpack.c.b16 %v242, %v241
  %v338 = vpack.c.b16 %v244, %v243
  %v339 = vpack.c.b16 %v246, %v245
  %v340 = vpack.c.b16 %v248, %v247
  %v341 = vpack.c.b16 %v250, %v249
  %v342 = vpack.c.b16 %v252, %v251
  %v343 = vpack.c.b16 %v254, %v253
  %v344 = vpack.c.b16 %v256, %v255
  %v345 = vpack.c.b16 %v258, %v257
  %v346 = vpack.c.b16 %v260, %v259
  %v347 = vpack.c.b16 %v262, %v261
  %v348 = vpack.c.b16 %v264, %v263
  %v349 = vpack.c.b16 %v266, %v265
  %v350 = vpack.c.b16 %v268, %v267
  %v351 = vpack.c.b16 %v270, %v269
  %v352 = vpack.c.b16 %v272, %v271
  %v353 = vpack.c.b16 %v274, %v273
  %v354 = vpack.c.b16 %v276, %v275
  %v355 = vpack.c.b16 %v278, %v277
  %v356 = vpack.c.b16 %v280, %v279
  %v357 = vpack.c.b16 %v282, %v281
  %v358 = vpack.c.b16 %v284, %v283
  %v359 = vpack.c.b16 %v286, %v285
  %v360 = vpack.c.b16 %v288, %v287
  %v361 = vpack.c.b16 %v290, %v289
  %v362 = vpack.c.b16 %v292, %v291
  %v363 = vpack.c.b16 %v294, %v293
  %v364 = vpack.c.b16 %v296, %v295
  %v365 = vpack.c.b16 %v298, %v297
  %v366 = vpack.c.b16 %v300, %v299
  %v367 = vpack.c.b16 %v302, %v301
  %v368 = vpack.c.b16 %v304, %v303
  %v369 = vpack.c.b16 %v306, %v305
  %v370 = vpack.c.b16 %v308, %v307
  %v371 = vpack.c.b16 %v310, %v309
  %v372 = vpack.c.b16 %v312, %v311
  %v373 = vpack.c.b16 %v314, %v313
  %v374 = vpack.c.b16 %v316, %v315
  %v375 = vpack.c.b16 %v318, %v317
  %v376 = vpack.c.b16 %v320, %v319
  %v377 = vpack.c.b16 %v322, %v321
  %v378 = vpack.c.b16 %v324, %v323
  %v379 = vpack.c.b16 %v326, %v325
  %v380 = vpack.c.b16 %v328, %v327
  %v381 = vpack.c.b16 %v330, %v329
  %v382 = vpack.c.b16 %v332, %v331
  %v383 = vpack.c.b16 %v334, %v333
  %v384 = vpack.c.b16 %v336, %v335
  %433 = vmatprep.subr.bf16.mxu0 0
  %434 = vmatpush1.bf16.msra.mxu0 %v337
  %435 = vmatprep.subr.bf16.mxu0 0
  %436 = vmatpush1.bf16.msra.mxu0 %v338
  %437 = vmatprep.subr.bf16.mxu0 0
  %438 = vmatpush1.bf16.msra.mxu0 %v339
  %439 = vmatprep.subr.bf16.mxu0 0
  %440 = vmatpush1.bf16.msra.mxu0 %v340
  %441 = vmatprep.subr.bf16.mxu0 0
  %442 = vmatpush1.bf16.msra.mxu0 %v341
  %443 = vmatprep.subr.bf16.mxu0 0
  %444 = vmatpush1.bf16.msra.mxu0 %v342
  %445 = vmatprep.subr.bf16.mxu0 0
  %446 = vmatpush1.bf16.msra.mxu0 %v343
  %447 = vmatprep.subr.bf16.mxu0 0
  %448 = vmatpush1.bf16.msra.mxu0 %v344
  %449 = vmatprep.subr.bf16.mxu0 0
  %450 = vmatpush1.bf16.msra.mxu0 %v345
  %451 = vmatprep.subr.bf16.mxu0 0
  %452 = vmatpush1.bf16.msra.mxu0 %v346
  %453 = vmatprep.subr.bf16.mxu0 0
  %454 = vmatpush1.bf16.msra.mxu0 %v347
  %455 = vmatprep.subr.bf16.mxu0 0
  %456 = vmatpush1.bf16.msra.mxu0 %v348
  %457 = vmatprep.subr.bf16.mxu0 0
  %458 = vmatpush1.bf16.msra.mxu0 %v349
  %459 = vmatprep.subr.bf16.mxu0 0
  %460 = vmatpush1.bf16.msra.mxu0 %v350
  %461 = vmatprep.subr.bf16.mxu0 0
  %462 = vmatpush1.bf16.msra.mxu0 %v351
  %463 = vmatprep.subr.bf16.mxu0 0
  %464 = vmatpush1.bf16.msra.mxu0 %v352
  %465 = vmatprep.mubr.bf16.mxu0 %v134
  %466 = vmatmul.mubr.bf16.gmra.mrb[0].mxu0 %v133
  %v467 = vpop.f32.mrb[0].mxu0
  %v468 = vadd.f32 %v122, %v467
  %v469 = vpop.f32.mrb[0].mxu0
  %v470 = vpop.f32.mrb[0].mxu0
  %v471 = vpop.f32.mrb[0].mxu0
  %472 = vdwg.mxu0
  %473 = vmatprep.subr.bf16.mxu0 0
  %474 = vmatpush1.bf16.msra.mxu0 %v353
  %475 = vmatprep.subr.bf16.mxu0 0
  %476 = vmatpush1.bf16.msra.mxu0 %v354
  %477 = vmatprep.subr.bf16.mxu0 0
  %478 = vmatpush1.bf16.msra.mxu0 %v355
  %479 = vmatprep.subr.bf16.mxu0 0
  %480 = vmatpush1.bf16.msra.mxu0 %v356
  %481 = vmatprep.subr.bf16.mxu0 0
  %482 = vmatpush1.bf16.msra.mxu0 %v357
  %483 = vmatprep.subr.bf16.mxu0 0
  %484 = vmatpush1.bf16.msra.mxu0 %v358
  %485 = vmatprep.subr.bf16.mxu0 0
  %486 = vmatpush1.bf16.msra.mxu0 %v359
  %487 = vmatprep.subr.bf16.mxu0 0
  %488 = vmatpush1.bf16.msra.mxu0 %v360
  %489 = vmatprep.subr.bf16.mxu0 0
  %490 = vmatpush1.bf16.msra.mxu0 %v361
  %491 = vmatprep.subr.bf16.mxu0 0
  %492 = vmatpush1.bf16.msra.mxu0 %v362
  %493 = vmatprep.subr.bf16.mxu0 0
  %494 = vmatpush1.bf16.msra.mxu0 %v363
  %495 = vmatprep.subr.bf16.mxu0 0
  %496 = vmatpush1.bf16.msra.mxu0 %v364
  %497 = vmatprep.subr.bf16.mxu0 0
  %498 = vmatpush1.bf16.msra.mxu0 %v365
  %499 = vmatprep.subr.bf16.mxu0 0
  %500 = vmatpush1.bf16.msra.mxu0 %v366
  %501 = vmatprep.subr.bf16.mxu0 0
  %502 = vmatpush1.bf16.msra.mxu0 %v367
  %503 = vmatprep.subr.bf16.mxu0 0
  %504 = vmatpush1.bf16.msra.mxu0 %v368
  %505 = vmatprep.mubr.bf16.mxu0 %v136
  %506 = vmatmul.mubr.bf16.gmra.mrb[0].mxu0 %v135
  %v507 = vpop.f32.mrb[0].mxu0
  %v508 = vadd.f32 %v468, %v507
  %v509 = vpop.f32.mrb[0].mxu0
  %v510 = vpop.f32.mrb[0].mxu0
  %v511 = vpop.f32.mrb[0].mxu0
  %512 = vdwg.mxu0
  %513 = vmatprep.subr.bf16.mxu0 0
  %514 = vmatpush1.bf16.msra.mxu0 %v369
  %515 = vmatprep.subr.bf16.mxu0 0
  %516 = vmatpush1.bf16.msra.mxu0 %v370
  %517 = vmatprep.subr.bf16.mxu0 0
  %518 = vmatpush1.bf16.msra.mxu0 %v371
  %519 = vmatprep.subr.bf16.mxu0 0
  %520 = vmatpush1.bf16.msra.mxu0 %v372
  %521 = vmatprep.subr.bf16.mxu0 0
  %522 = vmatpush1.bf16.msra.mxu0 %v373
  %523 = vmatprep.subr.bf16.mxu0 0
  %524 = vmatpush1.bf16.msra.mxu0 %v374
  %525 = vmatprep.subr.bf16.mxu0 0
  %526 = vmatpush1.bf16.msra.mxu0 %v375
  %527 = vmatprep.subr.bf16.mxu0 0
  %528 = vmatpush1.bf16.msra.mxu0 %v376
  %529 = vmatprep.subr.bf16.mxu0 0
  %530 = vmatpush1.bf16.msra.mxu0 %v377
  %531 = vmatprep.subr.bf16.mxu0 0
  %532 = vmatpush1.bf16.msra.mxu0 %v378
  %533 = vmatprep.subr.bf16.mxu0 0
  %534 = vmatpush1.bf16.msra.mxu0 %v379
  %535 = vmatprep.subr.bf16.mxu0 0
  %536 = vmatpush1.bf16.msra.mxu0 %v380
  %537 = vmatprep.subr.bf16.mxu0 0
  %538 = vmatpush1.bf16.msra.mxu0 %v381
  %539 = vmatprep.subr.bf16.mxu0 0
  %540 = vmatpush1.bf16.msra.mxu0 %v382
  %541 = vmatprep.subr.bf16.mxu0 0
  %542 = vmatpush1.bf16.msra.mxu0 %v383
  %543 = vmatprep.subr.bf16.mxu0 0
  %544 = vmatpush1.bf16.msra.mxu0 %v384
  %545 = vmatprep.mubr.bf16.mxu0 %v138
  %546 = vmatmul.mubr.bf16.gmra.mrb[0].mxu0 %v137
  %v547 = vpop.f32.mrb[0].mxu0
  %v548 = vadd.f32 %v508, %v547
  %v549 = vpop.f32.mrb[0].mxu0
  %v550 = vpop.f32.mrb[0].mxu0
  %v551 = vpop.f32.mrb[0].mxu0
  %552 = vdwg.mxu0
  %v553 = vld [vmem:[%s3] sm:$0x3]
  %vm554 = vcmask 254976
  %555 = vst.msk [vmem:[%s4] sm:$0x3] %vm554, %v553
  %v556 = vld [vmem:[%s3 + $0x2] sm:$0xff]
  %v557 = vadd.f32 %v556, %v548
  %vm558 = vcmask 261120
  %559 = vst.msk [vmem:[%s4 + $0x2] sm:$0xff] %vm558, %v557
  // Predicated region
  $region18: #{sapiens_wrapper_forward.2} parent=0 // pred_check
    _
  $region19: #{sapiens_wrapper_forward.2} parent=0 // pred_check_branch
    %561 = sbr.rel (0) target = $region21
  $region20: #{sapiens_wrapper_forward.2} parent=0 // pred_region
    _
  $region21: #{sapiens_wrapper_forward.2} parent=0 // pred_fallthru
    _
  // Predicated region
  $region22: #{sapiens_wrapper_forward.2} parent=0 // pred_check
    _
  $region23: #{sapiens_wrapper_forward.2} parent=0 // pred_check_branch
    %563 = sbr.rel (0) target = $region25
  $region24: #{sapiens_wrapper_forward.2} parent=0 // pred_region
    _
  $region25: #{sapiens_wrapper_forward.2} parent=0 // pred_fallthru
    _

// kernel: sapiens_wrapper_forward.3
$region0: #{sapiens_wrapper_forward.3}
  #allocation0 [shape = 'u32[]', space=smem, size = 0x4, offset = 0x4, fixed_abs, tag = 'smem constant byte address 0x4 - core index']
  #allocation1 [shape = 'u32[144,128]{1,0:T(1,128)}', space=vmem, size = 0x12000, scoped, tag = 'internal scratch']
  #allocation2 [shape = 's32[1]{0}', space=sflag, size = 0x4, scoped, tag = 'scratch operand']
  #allocation3 [shape = 's32[]', space=sflag, size = 0x4, offset = 0, fixed_abs, tag = 'sflag constant byte address 0x0 - dummy sync flag']
  %s0 = inlined_call_operand.vmem [shape: f32[10,32], index: 0, kind: input, shape index: {}]
  %s1 = inlined_call_operand.vmem [shape: s32[10,1], index: 1, kind: input, shape index: {}]
  %s2 = inlined_call_operand.vmem [shape: s32[1,10], index: 2, kind: input, shape index: {}]
  %s3 = inlined_call_operand.vmem [shape: f32[2,1,32], index: 3, kind: input, shape index: {}]
  %s4 = inlined_call_operand.vmem [shape: f32[2,1,32], index: 4, kind: input, shape index: {}]
  %s5 = inlined_call_operand.vmem [shape: bf16[2,32,96], index: 5, kind: input, shape index: {}]
  %s6 = inlined_call_operand.vmem [shape: f32[2,1,96], index: 6, kind: input, shape index: {}]
  %s7 = inlined_call_operand.vmem [shape: bf16[2,32,32], index: 7, kind: input, shape index: {}]
  %s8 = inlined_call_operand.vmem [shape: f32[2,1,32], index: 8, kind: input, shape index: {}]
  %s9 = inlined_call_operand.vmem [shape: f32[2,1,32], index: 9, kind: input, shape index: {}]
  %s10 = inlined_call_operand.vmem [shape: f32[2,1,32], index: 10, kind: input, shape index: {}]
  %s11 = inlined_call_operand.vmem [shape: bf16[2,32,128], index: 11, kind: input, shape index: {}]
  %s12 = inlined_call_operand.vmem [shape: f32[2,1,128], index: 12, kind: input, shape index: {}]
  %s13 = inlined_call_operand.vmem [shape: bf16[2,128,32], index: 13, kind: input, shape index: {}]
  %s14 = inlined_call_operand.vmem [shape: f32[2,1,32], index: 14, kind: input, shape index: {}]
  %s15 = inlined_call_operand.vmem [shape: f32[1,32], index: 15, kind: input, shape index: {}]
  %s16 = inlined_call_operand.vmem [shape: f32[1,32], index: 16, kind: input, shape index: {}]
  %s17 = inlined_call_operand.vmem [shape: f32[10,32], index: 17, kind: output, shape index: {}]
  %s18 = sld [smem:[#allocation0]]
  $region146: #{sapiens_wrapper_forward.3} parent=0
    _
  %s20 = ssub.s32 1, %s18
  %s21 = scalar_select 0, %s20, %s18
  loop: start=0, step=1, limit=4
  $region2: #{sapiens_wrapper_forward.3} parent=0 // loop_pre_header
    _
  $region3: #{sapiens_wrapper_forward.3} parent=0 // loop_header
    %s23 = sphi 0, %s27
    %p24 = scmp.ge.s32.totalorder %s23, 4
    %s31 = sphi 0, %s31
    %s33 = sphi 0, %s31
    %s34 = sphi 0, %s33
    %s48 = sphi 0, %s34
    %s52 = sphi 0, %s52
    %s54 = sphi 0, %s52
    %s55 = sphi 0, %s54
    %s69 = sphi 0, %s55
    %s75 = sphi 0, %s77
    %s78 = sphi 0, %s75
    %s79 = sphi 0, %s78
    %s95 = sphi 0, %s79
    %s101 = sphi 0, %s103
    %s104 = sphi 0, %s101
    %s105 = sphi 0, %s104
    %s121 = sphi 0, %s105
    %s127 = sphi 0, %s129
    %s130 = sphi 0, %s127
    %s131 = sphi 0, %s130
    %s147 = sphi 0, %s131
    %s153 = sphi 0, %s155
    %s156 = sphi 0, %s153
    %s157 = sphi 0, %s156
    %s173 = sphi 0, %s157
    %s179 = sphi 0, %s181
    %s182 = sphi 0, %s179
    %s183 = sphi 0, %s182
    %s199 = sphi 0, %s183
    %s205 = sphi 0, %s207
    %s208 = sphi 0, %s205
    %s209 = sphi 0, %s208
    %s225 = sphi 0, %s209
    %s231 = sphi 0, %s233
    %s234 = sphi 0, %s231
    %s235 = sphi 0, %s234
    %s251 = sphi 0, %s235
    %s257 = sphi 0, %s259
    %s260 = sphi 0, %s257
    %s261 = sphi 0, %s260
    %s277 = sphi 0, %s261
    %s283 = sphi 0, %s285
    %s286 = sphi 0, %s283
    %s287 = sphi 0, %s286
    %s303 = sphi 0, %s287
    %s309 = sphi 0, %s311
    %s312 = sphi 0, %s309
    %s313 = sphi 0, %s312
    %s329 = sphi 0, %s313
    %s335 = sphi 0, %s337
    %s338 = sphi 0, %s335
    %s339 = sphi 0, %s338
    %s355 = sphi 0, %s339
    %s361 = sphi 0, %s363
    %s364 = sphi 0, %s361
    %s365 = sphi 0, %s364
    %s381 = sphi 0, %s365
    %s385 = sphi 0, %s385
    %s387 = sphi 0, %s385
    %s388 = sphi 0, %s387
    %s402 = sphi 0, %s388
    %s406 = sphi 0, %s406
    %s408 = sphi 0, %s406
    %s409 = sphi 0, %s408
    %s423 = sphi 0, %s409
    %s427 = sphi 0, %s427
    %s429 = sphi 0, %s427
    %s430 = sphi 0, %s429
    %s444 = sphi 0, %s430
  $region4: #{sapiens_wrapper_forward.3} parent=0 // loop_header_branch
    %26 = sbr.rel (%p24) target = $region8
  $region5: #{sapiens_wrapper_forward.3} parent=0 // loop_body
    %s28 = ssub.s32 %s23, 1
    %s29 = ssub.s32 %s23, 2
    %s30 = sadd.s32 %s23, 1
    %s32 = sadd.s32 %s31, 1
    %p35 = scmp.eq.s32.totalorder %s23, 1
    %p36 = scmp.ne.s32.totalorder %s31, %s33
    %p37 = scmp.eq.s32.totalorder %s23, 0
    %p38 = por %p36, %p37
    %p39 = scmp.ne.s32.totalorder %s31, %s33
    %p40 = scmp.eq.s32.totalorder %s28, 1
    %p41 = por %p39, %p40
    %p42 = scmp.ne.s32.totalorder %s33, %s34
    %p43 = scmp.eq.s32.totalorder %s28, 0
    %p44 = por %p42, %p43
    %p45 = scmp.ne.s32.totalorder %s33, %s34
    %p46 = scmp.eq.s32.totalorder %s29, 1
    %p47 = por %p45, %p46
    %p49 = scmp.ne.s32.totalorder %s34, %s48
    %p50 = scmp.eq.s32.totalorder %s29, 0
    %p51 = por %p49, %p50
    %s53 = sadd.s32 %s52, 1
    %p56 = scmp.eq.s32.totalorder %s23, 1
    %p57 = scmp.ne.s32.totalorder %s52, %s54
    %p58 = scmp.eq.s32.totalorder %s23, 0
    %p59 = por %p57, %p58
    %p60 = scmp.ne.s32.totalorder %s52, %s54
    %p61 = scmp.eq.s32.totalorder %s28, 1
    %p62 = por %p60, %p61
    %p63 = scmp.ne.s32.totalorder %s54, %s55
    %p64 = scmp.eq.s32.totalorder %s28, 0
    %p65 = por %p63, %p64
    %p66 = scmp.ne.s32.totalorder %s54, %s55
    %p67 = scmp.eq.s32.totalorder %s29, 1
    %p68 = por %p66, %p67
    %p70 = scmp.ne.s32.totalorder %s55, %s69
    %p71 = scmp.eq.s32.totalorder %s29, 0
    %p72 = por %p70, %p71
    %s73 = ssub.s32 %s23, %s30
    %p74 = scmp.eq.s32.totalorder %s73, 0
    %s76 = sadd.s32 %s75, 1
    %s77 = scalar_select %p74, %s75, %s76
    %p80 = pneg %p74
    %p81 = scmp.eq.s32.totalorder %s23, 1
    %p82 = por %p80, %p81
    %p83 = scmp.ne.s32.totalorder %s75, %s78
    %p84 = scmp.eq.s32.totalorder %s23, 0
    %p85 = por %p83, %p84
    %p86 = scmp.ne.s32.totalorder %s75, %s78
    %p87 = scmp.eq.s32.totalorder %s28, 1
    %p88 = por %p86, %p87
    %p89 = scmp.ne.s32.totalorder %s78, %s79
    %p90 = scmp.eq.s32.totalorder %s28, 0
    %p91 = por %p89, %p90
    %p92 = scmp.ne.s32.totalorder %s78, %s79
    %p93 = scmp.eq.s32.totalorder %s29, 1
    %p94 = por %p92, %p93
    %p96 = scmp.ne.s32.totalorder %s79, %s95
    %p97 = scmp.eq.s32.totalorder %s29, 0
    %p98 = por %p96, %p97
    %s99 = ssub.s32 %s23, %s30
    %p100 = scmp.eq.s32.totalorder %s99, 0
    %s102 = sadd.s32 %s101, 1
    %s103 = scalar_select %p100, %s101, %s102
    %p106 = pneg %p100
    %p107 = scmp.eq.s32.totalorder %s23, 1
    %p108 = por %p106, %p107
    %p109 = scmp.ne.s32.totalorder %s101, %s104
    %p110 = scmp.eq.s32.totalorder %s23, 0
    %p111 = por %p109, %p110
    %p112 = scmp.ne.s32.totalorder %s101, %s104
    %p113 = scmp.eq.s32.totalorder %s28, 1
    %p114 = por %p112, %p113
    %p115 = scmp.ne.s32.totalorder %s104, %s105
    %p116 = scmp.eq.s32.totalorder %s28, 0
    %p117 = por %p115, %p116
    %p118 = scmp.ne.s32.totalorder %s104, %s105
    %p119 = scmp.eq.s32.totalorder %s29, 1
    %p120 = por %p118, %p119
    %p122 = scmp.ne.s32.totalorder %s105, %s121
    %p123 = scmp.eq.s32.totalorder %s29, 0
    %p124 = por %p122, %p123
    %s125 = ssub.s32 %s23, %s30
    %p126 = scmp.eq.s32.totalorder %s125, 0
    %s128 = sadd.s32 %s127, 1
    %s129 = scalar_select %p126, %s127, %s128
    %p132 = pneg %p126
    %p133 = scmp.eq.s32.totalorder %s23, 1
    %p134 = por %p132, %p133
    %p135 = scmp.ne.s32.totalorder %s127, %s130
    %p136 = scmp.eq.s32.totalorder %s23, 0
    %p137 = por %p135, %p136
    %p138 = scmp.ne.s32.totalorder %s127, %s130
    %p139 = scmp.eq.s32.totalorder %s28, 1
    %p140 = por %p138, %p139
    %p141 = scmp.ne.s32.totalorder %s130, %s131
    %p142 = scmp.eq.s32.totalorder %s28, 0
    %p143 = por %p141, %p142
    %p144 = scmp.ne.s32.totalorder %s130, %s131
    %p145 = scmp.eq.s32.totalorder %s29, 1
    %p146 = por %p144, %p145
    %p148 = scmp.ne.s32.totalorder %s131, %s147
    %p149 = scmp.eq.s32.totalorder %s29, 0
    %p150 = por %p148, %p149
    %s151 = ssub.s32 %s23, %s30
    %p152 = scmp.eq.s32.totalorder %s151, 0
    %s154 = sadd.s32 %s153, 1
    %s155 = scalar_select %p152, %s153, %s154
    %p158 = pneg %p152
    %p159 = scmp.eq.s32.totalorder %s23, 1
    %p160 = por %p158, %p159
    %p161 = scmp.ne.s32.totalorder %s153, %s156
    %p162 = scmp.eq.s32.totalorder %s23, 0
    %p163 = por %p161, %p162
    %p164 = scmp.ne.s32.totalorder %s153, %s156
    %p165 = scmp.eq.s32.totalorder %s28, 1
    %p166 = por %p164, %p165
    %p167 = scmp.ne.s32.totalorder %s156, %s157
    %p168 = scmp.eq.s32.totalorder %s28, 0
    %p169 = por %p167, %p168
    %p170 = scmp.ne.s32.totalorder %s156, %s157
    %p171 = scmp.eq.s32.totalorder %s29, 1
    %p172 = por %p170, %p171
    %p174 = scmp.ne.s32.totalorder %s157, %s173
    %p175 = scmp.eq.s32.totalorder %s29, 0
    %p176 = por %p174, %p175
    %s177 = ssub.s32 %s23, %s30
    %p178 = scmp.eq.s32.totalorder %s177, 0
    %s180 = sadd.s32 %s179, 1
    %s181 = scalar_select %p178, %s179, %s180
    %p184 = pneg %p178
    %p185 = scmp.eq.s32.totalorder %s23, 1
    %p186 = por %p184, %p185
    %p187 = scmp.ne.s32.totalorder %s179, %s182
    %p188 = scmp.eq.s32.totalorder %s23, 0
    %p189 = por %p187, %p188
    %p190 = scmp.ne.s32.totalorder %s179, %s182
    %p191 = scmp.eq.s32.totalorder %s28, 1
    %p192 = por %p190, %p191
    %p193 = scmp.ne.s32.totalorder %s182, %s183
    %p194 = scmp.eq.s32.totalorder %s28, 0
    %p195 = por %p193, %p194
    %p196 = scmp.ne.s32.totalorder %s182, %s183
    %p197 = scmp.eq.s32.totalorder %s29, 1
    %p198 = por %p196, %p197
    %p200 = scmp.ne.s32.totalorder %s183, %s199
    %p201 = scmp.eq.s32.totalorder %s29, 0
    %p202 = por %p200, %p201
    %s203 = ssub.s32 %s23, %s30
    %p204 = scmp.eq.s32.totalorder %s203, 0
    %s206 = sadd.s32 %s205, 1
    %s207 = scalar_select %p204, %s205, %s206
    %p210 = pneg %p204
    %p211 = scmp.eq.s32.totalorder %s23, 1
    %p212 = por %p210, %p211
    %p213 = scmp.ne.s32.totalorder %s205, %s208
    %p214 = scmp.eq.s32.totalorder %s23, 0
    %p215 = por %p213, %p214
    %p216 = scmp.ne.s32.totalorder %s205, %s208
    %p217 = scmp.eq.s32.totalorder %s28, 1
    %p218 = por %p216, %p217
    %p219 = scmp.ne.s32.totalorder %s208, %s209
    %p220 = scmp.eq.s32.totalorder %s28, 0
    %p221 = por %p219, %p220
    %p222 = scmp.ne.s32.totalorder %s208, %s209
    %p223 = scmp.eq.s32.totalorder %s29, 1
    %p224 = por %p222, %p223
    %p226 = scmp.ne.s32.totalorder %s209, %s225
    %p227 = scmp.eq.s32.totalorder %s29, 0
    %p228 = por %p226, %p227
    %s229 = ssub.s32 %s23, %s30
    %p230 = scmp.eq.s32.totalorder %s229, 0
    %s232 = sadd.s32 %s231, 1
    %s233 = scalar_select %p230, %s231, %s232
    %p236 = pneg %p230
    %p237 = scmp.eq.s32.totalorder %s23, 1
    %p238 = por %p236, %p237
    %p239 = scmp.ne.s32.totalorder %s231, %s234
    %p240 = scmp.eq.s32.totalorder %s23, 0
    %p241 = por %p239, %p240
    %p242 = scmp.ne.s32.totalorder %s231, %s234
    %p243 = scmp.eq.s32.totalorder %s28, 1
    %p244 = por %p242, %p243
    %p245 = scmp.ne.s32.totalorder %s234, %s235
    %p246 = scmp.eq.s32.totalorder %s28, 0
    %p247 = por %p245, %p246
    %p248 = scmp.ne.s32.totalorder %s234, %s235
    %p249 = scmp.eq.s32.totalorder %s29, 1
    %p250 = por %p248, %p249
    %p252 = scmp.ne.s32.totalorder %s235, %s251
    %p253 = scmp.eq.s32.totalorder %s29, 0
    %p254 = por %p252, %p253
    %s255 = ssub.s32 %s23, %s30
    %p256 = scmp.eq.s32.totalorder %s255, 0
    %s258 = sadd.s32 %s257, 1
    %s259 = scalar_select %p256, %s257, %s258
    %p262 = pneg %p256
    %p263 = scmp.eq.s32.totalorder %s23, 1
    %p264 = por %p262, %p263
    %p265 = scmp.ne.s32.totalorder %s257, %s260
    %p266 = scmp.eq.s32.totalorder %s23, 0
    %p267 = por %p265, %p266
    %p268 = scmp.ne.s32.totalorder %s257, %s260
    %p269 = scmp.eq.s32.totalorder %s28, 1
    %p270 = por %p268, %p269
    %p271 = scmp.ne.s32.totalorder %s260, %s261
    %p272 = scmp.eq.s32.totalorder %s28, 0
    %p273 = por %p271, %p272
    %p274 = scmp.ne.s32.totalorder %s260, %s261
    %p275 = scmp.eq.s32.totalorder %s29, 1
    %p276 = por %p274, %p275
    %p278 = scmp.ne.s32.totalorder %s261, %s277
    %p279 = scmp.eq.s32.totalorder %s29, 0
    %p280 = por %p278, %p279
    %s281 = ssub.s32 %s23, %s30
    %p282 = scmp.eq.s32.totalorder %s281, 0
    %s284 = sadd.s32 %s283, 1
    %s285 = scalar_select %p282, %s283, %s284
    %p288 = pneg %p282
    %p289 = scmp.eq.s32.totalorder %s23, 1
    %p290 = por %p288, %p289
    %p291 = scmp.ne.s32.totalorder %s283, %s286
    %p292 = scmp.eq.s32.totalorder %s23, 0
    %p293 = por %p291, %p292
    %p294 = scmp.ne.s32.totalorder %s283, %s286
    %p295 = scmp.eq.s32.totalorder %s28, 1
    %p296 = por %p294, %p295
    %p297 = scmp.ne.s32.totalorder %s286, %s287
    %p298 = scmp.eq.s32.totalorder %s28, 0
    %p299 = por %p297, %p298
    %p300 = scmp.ne.s32.totalorder %s286, %s287
    %p301 = scmp.eq.s32.totalorder %s29, 1
    %p302 = por %p300, %p301
    %p304 = scmp.ne.s32.totalorder %s287, %s303
    %p305 = scmp.eq.s32.totalorder %s29, 0
    %p306 = por %p304, %p305
    %s307 = ssub.s32 %s23, %s30
    %p308 = scmp.eq.s32.totalorder %s307, 0
    %s310 = sadd.s32 %s309, 1
    %s311 = scalar_select %p308, %s309, %s310
    %p314 = pneg %p308
    %p315 = scmp.eq.s32.totalorder %s23, 1
    %p316 = por %p314, %p315
    %p317 = scmp.ne.s32.totalorder %s309, %s312
    %p318 = scmp.eq.s32.totalorder %s23, 0
    %p319 = por %p317, %p318
    %p320 = scmp.ne.s32.totalorder %s309, %s312
    %p321 = scmp.eq.s32.totalorder %s28, 1
    %p322 = por %p320, %p321
    %p323 = scmp.ne.s32.totalorder %s312, %s313
    %p324 = scmp.eq.s32.totalorder %s28, 0
    %p325 = por %p323, %p324
    %p326 = scmp.ne.s32.totalorder %s312, %s313
    %p327 = scmp.eq.s32.totalorder %s29, 1
    %p328 = por %p326, %p327
    %p330 = scmp.ne.s32.totalorder %s313, %s329
    %p331 = scmp.eq.s32.totalorder %s29, 0
    %p332 = por %p330, %p331
    %s333 = ssub.s32 %s23, %s30
    %p334 = scmp.eq.s32.totalorder %s333, 0
    %s336 = sadd.s32 %s335, 1
    %s337 = scalar_select %p334, %s335, %s336
    %p340 = pneg %p334
    %p341 = scmp.eq.s32.totalorder %s23, 1
    %p342 = por %p340, %p341
    %p343 = scmp.ne.s32.totalorder %s335, %s338
    %p344 = scmp.eq.s32.totalorder %s23, 0
    %p345 = por %p343, %p344
    %p346 = scmp.ne.s32.totalorder %s335, %s338
    %p347 = scmp.eq.s32.totalorder %s28, 1
    %p348 = por %p346, %p347
    %p349 = scmp.ne.s32.totalorder %s338, %s339
    %p350 = scmp.eq.s32.totalorder %s28, 0
    %p351 = por %p349, %p350
    %p352 = scmp.ne.s32.totalorder %s338, %s339
    %p353 = scmp.eq.s32.totalorder %s29, 1
    %p354 = por %p352, %p353
    %p356 = scmp.ne.s32.totalorder %s339, %s355
    %p357 = scmp.eq.s32.totalorder %s29, 0
    %p358 = por %p356, %p357
    %s359 = ssub.s32 %s23, %s30
    %p360 = scmp.eq.s32.totalorder %s359, 0
    %s362 = sadd.s32 %s361, 1
    %s363 = scalar_select %p360, %s361, %s362
    %p366 = pneg %p360
    %p367 = scmp.eq.s32.totalorder %s23, 1
    %p368 = por %p366, %p367
    %p369 = scmp.ne.s32.totalorder %s361, %s364
    %p370 = scmp.eq.s32.totalorder %s23, 0
    %p371 = por %p369, %p370
    %p372 = scmp.ne.s32.totalorder %s361, %s364
    %p373 = scmp.eq.s32.totalorder %s28, 1
    %p374 = por %p372, %p373
    %p375 = scmp.ne.s32.totalorder %s364, %s365
    %p376 = scmp.eq.s32.totalorder %s28, 0
    %p377 = por %p375, %p376
    %p378 = scmp.ne.s32.totalorder %s364, %s365
    %p379 = scmp.eq.s32.totalorder %s29, 1
    %p380 = por %p378, %p379
    %p382 = scmp.ne.s32.totalorder %s365, %s381
    %p383 = scmp.eq.s32.totalorder %s29, 0
    %p384 = por %p382, %p383
    %s386 = sadd.s32 %s385, 1
    %p389 = scmp.eq.s32.totalorder %s23, 1
    %p390 = scmp.ne.s32.totalorder %s385, %s387
    %p391 = scmp.eq.s32.totalorder %s23, 0
    %p392 = por %p390, %p391
    %p393 = scmp.ne.s32.totalorder %s385, %s387
    %p394 = scmp.eq.s32.totalorder %s28, 1
    %p395 = por %p393, %p394
    %p396 = scmp.ne.s32.totalorder %s387, %s388
    %p397 = scmp.eq.s32.totalorder %s28, 0
    %p398 = por %p396, %p397
    %p399 = scmp.ne.s32.totalorder %s387, %s388
    %p400 = scmp.eq.s32.totalorder %s29, 1
    %p401 = por %p399, %p400
    %p403 = scmp.ne.s32.totalorder %s388, %s402
    %p404 = scmp.eq.s32.totalorder %s29, 0
    %p405 = por %p403, %p404
    %s407 = sadd.s32 %s406, 1
    %p410 = scmp.eq.s32.totalorder %s23, 1
    %p411 = scmp.ne.s32.totalorder %s406, %s408
    %p412 = scmp.eq.s32.totalorder %s23, 0
    %p413 = por %p411, %p412
    %p414 = scmp.ne.s32.totalorder %s406, %s408
    %p415 = scmp.eq.s32.totalorder %s28, 1
    %p416 = por %p414, %p415
    %p417 = scmp.ne.s32.totalorder %s408, %s409
    %p418 = scmp.eq.s32.totalorder %s28, 0
    %p419 = por %p417, %p418
    %p420 = scmp.ne.s32.totalorder %s408, %s409
    %p421 = scmp.eq.s32.totalorder %s29, 1
    %p422 = por %p420, %p421
    %p424 = scmp.ne.s32.totalorder %s409, %s423
    %p425 = scmp.eq.s32.totalorder %s29, 0
    %p426 = por %p424, %p425
    %s428 = sadd.s32 %s427, 1
    %p431 = scmp.eq.s32.totalorder %s23, 1
    %p432 = scmp.ne.s32.totalorder %s427, %s429
    %p433 = scmp.eq.s32.totalorder %s23, 0
    %p434 = por %p432, %p433
    %p435 = scmp.ne.s32.totalorder %s427, %s429
    %p436 = scmp.eq.s32.totalorder %s28, 1
    %p437 = por %p435, %p436
    %p438 = scmp.ne.s32.totalorder %s429, %s430
    %p439 = scmp.eq.s32.totalorder %s28, 0
    %p440 = por %p438, %p439
    %p441 = scmp.ne.s32.totalorder %s429, %s430
    %p442 = scmp.eq.s32.totalorder %s29, 1
    %p443 = por %p441, %p442
    %p445 = scmp.ne.s32.totalorder %s430, %s444
    %p446 = scmp.eq.s32.totalorder %s29, 0
    %p447 = por %p445, %p446
    %p448 = scmp.le.s32.totalorder 1, %s23
    %p449 = scmp.lt.s32.totalorder %s23, 3
    %p450 = pnand %p448, %p449
    %p451 = pneg %p450
    // Predicated region
    $region9: #{sapiens_wrapper_forward.3} parent=5 // pred_check
      _
    $region10: #{sapiens_wrapper_forward.3} parent=5 // pred_check_branch
      %453 = sbr.rel (%p450) target = $region12
    $region11: #{sapiens_wrapper_forward.3} parent=5 // pred_region
      %s454 = ssub.s32 %s23, 1
      // Predicated region
      $region13: #{sapiens_wrapper_forward.3} parent=11 // pred_check
        %p455 = pneg %p44
      $region14: #{sapiens_wrapper_forward.3} parent=11 // pred_check_branch
        %457 = sbr.rel (%p455) target = $region16
      $region15: #{sapiens_wrapper_forward.3} parent=11 // pred_region
        _
      $region16: #{sapiens_wrapper_forward.3} parent=11 // pred_fallthru
        _
      // Predicated region
      $region17: #{sapiens_wrapper_forward.3} parent=11 // pred_check
        %p458 = pneg %p65
      $region18: #{sapiens_wrapper_forward.3} parent=11 // pred_check_branch
        %460 = sbr.rel (%p458) target = $region20
      $region19: #{sapiens_wrapper_forward.3} parent=11 // pred_region
        _
      $region20: #{sapiens_wrapper_forward.3} parent=11 // pred_fallthru
        _
      // Predicated region
      $region21: #{sapiens_wrapper_forward.3} parent=11 // pred_check
        %p461 = pneg %p398
      $region22: #{sapiens_wrapper_forward.3} parent=11 // pred_check_branch
        %463 = sbr.rel (%p461) target = $region24
      $region23: #{sapiens_wrapper_forward.3} parent=11 // pred_region
        _
      $region24: #{sapiens_wrapper_forward.3} parent=11 // pred_fallthru
        _
      // Predicated region
      $region25: #{sapiens_wrapper_forward.3} parent=11 // pred_check
        %p464 = pneg %p419
      $region26: #{sapiens_wrapper_forward.3} parent=11 // pred_check_branch
        %466 = sbr.rel (%p464) target = $region28
      $region27: #{sapiens_wrapper_forward.3} parent=11 // pred_region
        _
      $region28: #{sapiens_wrapper_forward.3} parent=11 // pred_fallthru
        _
    $region12: #{sapiens_wrapper_forward.3} parent=5 // pred_fallthru
      _
    %p467 = scmp.lt.s32.totalorder %s23, 2
    // Predicated region
    $region29: #{sapiens_wrapper_forward.3} parent=5 // pred_check
      %p468 = pneg %p467
    $region30: #{sapiens_wrapper_forward.3} parent=5 // pred_check_branch
      %470 = sbr.rel (%p468) target = $region32
    $region31: #{sapiens_wrapper_forward.3} parent=5 // pred_region
      // Predicated region
      $region33: #{sapiens_wrapper_forward.3} parent=31 // pred_check
        %p471 = pneg %p85
      $region34: #{sapiens_wrapper_forward.3} parent=31 // pred_check_branch
        %473 = sbr.rel (%p471) target = $region36
      $region35: #{sapiens_wrapper_forward.3} parent=31 // pred_region
        %p474 = scmp.lt.s32.totalorder %s23, 1
        %s475 = scalar_select %p474, %s23, 1
        %s476 = scalar_lea.vmem %s3, %s475
      $region36: #{sapiens_wrapper_forward.3} parent=31 // pred_fallthru
        _
      // Predicated region
      $region37: #{sapiens_wrapper_forward.3} parent=31 // pred_check
        %p477 = pneg %p111
      $region38: #{sapiens_wrapper_forward.3} parent=31 // pred_check_branch
        %479 = sbr.rel (%p477) target = $region40
      $region39: #{sapiens_wrapper_forward.3} parent=31 // pred_region
        %p480 = scmp.lt.s32.totalorder %s23, 1
        %s481 = scalar_select %p480, %s23, 1
        %s482 = scalar_lea.vmem %s4, %s481
      $region40: #{sapiens_wrapper_forward.3} parent=31 // pred_fallthru
        _
      // Predicated region
      $region41: #{sapiens_wrapper_forward.3} parent=31 // pred_check
        %p483 = pneg %p137
      $region42: #{sapiens_wrapper_forward.3} parent=31 // pred_check_branch
        %485 = sbr.rel (%p483) target = $region44
      $region43: #{sapiens_wrapper_forward.3} parent=31 // pred_region
        %p486 = scmp.lt.s32.totalorder %s23, 1
        %s487 = scalar_select %p486, %s23, 1
        %s488 = smul.addr %s487, 4
        %s489 = smul.addr %s488, 4
        %s490 = scalar_lea.vmem %s5, %s489
      $region44: #{sapiens_wrapper_forward.3} parent=31 // pred_fallthru
        _
      // Predicated region
      $region45: #{sapiens_wrapper_forward.3} parent=31 // pred_check
        %p491 = pneg %p163
      $region46: #{sapiens_wrapper_forward.3} parent=31 // pred_check_branch
        %493 = sbr.rel (%p491) target = $region48
      $region47: #{sapiens_wrapper_forward.3} parent=31 // pred_region
        %p494 = scmp.lt.s32.totalorder %s23, 1
        %s495 = scalar_select %p494, %s23, 1
        %s496 = scalar_lea.vmem %s6, %s495
      $region48: #{sapiens_wrapper_forward.3} parent=31 // pred_fallthru
        _
      // Predicated region
      $region49: #{sapiens_wrapper_forward.3} parent=31 // pred_check
        %p497 = pneg %p189
      $region50: #{sapiens_wrapper_forward.3} parent=31 // pred_check_branch
        %499 = sbr.rel (%p497) target = $region52
      $region51: #{sapiens_wrapper_forward.3} parent=31 // pred_region
        %p500 = scmp.lt.s32.totalorder %s23, 1
        %s501 = scalar_select %p500, %s23, 1
        %s502 = smul.addr %s501, 4
        %s503 = smul.addr %s502, 4
        %s504 = scalar_lea.vmem %s7, %s503
      $region52: #{sapiens_wrapper_forward.3} parent=31 // pred_fallthru
        _
      // Predicated region
      $region53: #{sapiens_wrapper_forward.3} parent=31 // pred_check
        %p505 = pneg %p215
      $region54: #{sapiens_wrapper_forward.3} parent=31 // pred_check_branch
        %507 = sbr.rel (%p505) target = $region56
      $region55: #{sapiens_wrapper_forward.3} parent=31 // pred_region
        %p508 = scmp.lt.s32.totalorder %s23, 1
        %s509 = scalar_select %p508, %s23, 1
        %s510 = scalar_lea.vmem %s8, %s509
      $region56: #{sapiens_wrapper_forward.3} parent=31 // pred_fallthru
        _
      // Predicated region
      $region57: #{sapiens_wrapper_forward.3} parent=31 // pred_check
        %p511 = pneg %p241
      $region58: #{sapiens_wrapper_forward.3} parent=31 // pred_check_branch
        %513 = sbr.rel (%p511) target = $region60
      $region59: #{sapiens_wrapper_forward.3} parent=31 // pred_region
        %p514 = scmp.lt.s32.totalorder %s23, 1
        %s515 = scalar_select %p514, %s23, 1
        %s516 = scalar_lea.vmem %s9, %s515
      $region60: #{sapiens_wrapper_forward.3} parent=31 // pred_fallthru
        _
      // Predicated region
      $region61: #{sapiens_wrapper_forward.3} parent=31 // pred_check
        %p517 = pneg %p267
      $region62: #{sapiens_wrapper_forward.3} parent=31 // pred_check_branch
        %519 = sbr.rel (%p517) target = $region64
      $region63: #{sapiens_wrapper_forward.3} parent=31 // pred_region
        %p520 = scmp.lt.s32.totalorder %s23, 1
        %s521 = scalar_select %p520, %s23, 1
        %s522 = scalar_lea.vmem %s10, %s521
      $region64: #{sapiens_wrapper_forward.3} parent=31 // pred_fallthru
        _
      // Predicated region
      $region65: #{sapiens_wrapper_forward.3} parent=31 // pred_check
        %p523 = pneg %p293
      $region66: #{sapiens_wrapper_forward.3} parent=31 // pred_check_branch
        %525 = sbr.rel (%p523) target = $region68
      $region67: #{sapiens_wrapper_forward.3} parent=31 // pred_region
        %p526 = scmp.lt.s32.totalorder %s23, 1
        %s527 = scalar_select %p526, %s23, 1
        %s528 = smul.addr %s527, 4
        %s529 = smul.addr %s528, 4
        %s530 = scalar_lea.vmem %s11, %s529
      $region68: #{sapiens_wrapper_forward.3} parent=31 // pred_fallthru
        _
      // Predicated region
      $region69: #{sapiens_wrapper_forward.3} parent=31 // pred_check
        %p531 = pneg %p319
      $region70: #{sapiens_wrapper_forward.3} parent=31 // pred_check_branch
        %533 = sbr.rel (%p531) target = $region72
      $region71: #{sapiens_wrapper_forward.3} parent=31 // pred_region
        %p534 = scmp.lt.s32.totalorder %s23, 1
        %s535 = scalar_select %p534, %s23, 1
        %s536 = scalar_lea.vmem %s12, %s535
      $region72: #{sapiens_wrapper_forward.3} parent=31 // pred_fallthru
        _
      // Predicated region
      $region73: #{sapiens_wrapper_forward.3} parent=31 // pred_check
        %p537 = pneg %p345
      $region74: #{sapiens_wrapper_forward.3} parent=31 // pred_check_branch
        %539 = sbr.rel (%p537) target = $region76
      $region75: #{sapiens_wrapper_forward.3} parent=31 // pred_region
        %p540 = scmp.lt.s32.totalorder %s23, 1
        %s541 = scalar_select %p540, %s23, 1
        %s542 = smul.addr %s541, 16
        %s543 = smul.addr %s542, 4
        %s544 = scalar_lea.vmem %s13, %s543
      $region76: #{sapiens_wrapper_forward.3} parent=31 // pred_fallthru
        _
      // Predicated region
      $region77: #{sapiens_wrapper_forward.3} parent=31 // pred_check
        %p545 = pneg %p371
      $region78: #{sapiens_wrapper_forward.3} parent=31 // pred_check_branch
        %547 = sbr.rel (%p545) target = $region80
      $region79: #{sapiens_wrapper_forward.3} parent=31 // pred_region
        %p548 = scmp.lt.s32.totalorder %s23, 1
        %s549 = scalar_select %p548, %s23, 1
        %s550 = scalar_lea.vmem %s14, %s549
      $region80: #{sapiens_wrapper_forward.3} parent=31 // pred_fallthru
        _
    $region32: #{sapiens_wrapper_forward.3} parent=5 // pred_fallthru
      _
    %p551 = scmp.le.s32.totalorder 1, %s23
    %p552 = scmp.lt.s32.totalorder %s23, 3
    %p553 = pnand %p551, %p552
    %p554 = pneg %p553
    // Predicated region
    $region81: #{sapiens_wrapper_forward.3} parent=5 // pred_check
      _
    $region82: #{sapiens_wrapper_forward.3} parent=5 // pred_check_branch
      %556 = sbr.rel (%p553) target = $region84
    $region83: #{sapiens_wrapper_forward.3} parent=5 // pred_region
      %s557 = ssub.s32 %s23, 1
      %p558 = pneg %p44
      %p559 = pneg %p41
      %p560 = pneg %p65
      %p561 = pneg %p62
      %p562 = scmp.lt.s32.totalorder %s28, 1
      %s563 = scalar_select %p562, %s28, 1
      %s564 = scalar_lea.vmem %s3, %s563
      %p565 = pneg %p91
      %p566 = pneg %p88
      %p567 = scmp.lt.s32.totalorder %s28, 1
      %s568 = scalar_select %p567, %s28, 1
      %s569 = scalar_lea.vmem %s4, %s568
      %p570 = pneg %p117
      %p571 = pneg %p114
      %p572 = scmp.lt.s32.totalorder %s28, 1
      %s573 = scalar_select %p572, %s28, 1
      %s574 = smul.addr %s573, 4
      %s575 = smul.addr %s574, 4
      %s576 = scalar_lea.vmem %s5, %s575
      %p577 = pneg %p143
      %p578 = pneg %p140
      %p579 = scmp.lt.s32.totalorder %s28, 1
      %s580 = scalar_select %p579, %s28, 1
      %s581 = scalar_lea.vmem %s6, %s580
      %p582 = pneg %p169
      %p583 = pneg %p166
      %p584 = scmp.lt.s32.totalorder %s28, 1
      %s585 = scalar_select %p584, %s28, 1
      %s586 = smul.addr %s585, 4
      %s587 = smul.addr %s586, 4
      %s588 = scalar_lea.vmem %s7, %s587
      %p589 = pneg %p195
      %p590 = pneg %p192
      %p591 = scmp.lt.s32.totalorder %s28, 1
      %s592 = scalar_select %p591, %s28, 1
      %s593 = scalar_lea.vmem %s8, %s592
      %p594 = pneg %p221
      %p595 = pneg %p218
      %p596 = scmp.lt.s32.totalorder %s28, 1
      %s597 = scalar_select %p596, %s28, 1
      %s598 = scalar_lea.vmem %s9, %s597
      %p599 = pneg %p247
      %p600 = pneg %p244
      %p601 = scmp.lt.s32.totalorder %s28, 1
      %s602 = scalar_select %p601, %s28, 1
      %s603 = scalar_lea.vmem %s10, %s602
      %p604 = pneg %p273
      %p605 = pneg %p270
      %p606 = scmp.lt.s32.totalorder %s28, 1
      %s607 = scalar_select %p606, %s28, 1
      %s608 = smul.addr %s607, 4
      %s609 = smul.addr %s608, 4
      %s610 = scalar_lea.vmem %s11, %s609
      %p611 = pneg %p299
      %p612 = pneg %p296
      %p613 = scmp.lt.s32.totalorder %s28, 1
      %s614 = scalar_select %p613, %s28, 1
      %s615 = scalar_lea.vmem %s12, %s614
      %p616 = pneg %p325
      %p617 = pneg %p322
      %p618 = scmp.lt.s32.totalorder %s28, 1
      %s619 = scalar_select %p618, %s28, 1
      %s620 = smul.addr %s619, 16
      %s621 = smul.addr %s620, 4
      %s622 = scalar_lea.vmem %s13, %s621
      %p623 = pneg %p351
      %p624 = pneg %p348
      %p625 = scmp.lt.s32.totalorder %s28, 1
      %s626 = scalar_select %p625, %s28, 1
      %s627 = scalar_lea.vmem %s14, %s626
      %p628 = pneg %p377
      %p629 = pneg %p374
      %p630 = pneg %p398
      %p631 = pneg %p395
      %p632 = pneg %p419
      %p633 = pneg %p416
      %p634 = pneg %p440
      %p635 = pneg %p437
      %p636 = scmp.lt.s32.totalorder %s28, 1
      %s637 = scalar_select %p636, %s28, 1
      %s638 = scalar_lea.vmem %s3, %s637
      %p639 = scmp.lt.s32.totalorder %s28, 1
      %s640 = scalar_select %p639, %s28, 1
      %s641 = scalar_lea.vmem %s4, %s640
      %p642 = scmp.lt.s32.totalorder %s28, 1
      %s643 = scalar_select %p642, %s28, 1
      %s644 = smul.addr %s643, 4
      %s645 = smul.addr %s644, 4
      %s646 = scalar_lea.vmem %s5, %s645
      %p647 = scmp.lt.s32.totalorder %s28, 1
      %s648 = scalar_select %p647, %s28, 1
      %s649 = scalar_lea.vmem %s6, %s648
      %p650 = scmp.lt.s32.totalorder %s28, 1
      %s651 = scalar_select %p650, %s28, 1
      %s652 = smul.addr %s651, 4
      %s653 = smul.addr %s652, 4
      %s654 = scalar_lea.vmem %s7, %s653
      %p655 = scmp.lt.s32.totalorder %s28, 1
      %s656 = scalar_select %p655, %s28, 1
      %s657 = scalar_lea.vmem %s8, %s656
      %p658 = scmp.lt.s32.totalorder %s28, 1
      %s659 = scalar_select %p658, %s28, 1
      %s660 = scalar_lea.vmem %s9, %s659
      %p661 = scmp.lt.s32.totalorder %s28, 1
      %s662 = scalar_select %p661, %s28, 1
      %s663 = scalar_lea.vmem %s10, %s662
      %p664 = scmp.lt.s32.totalorder %s28, 1
      %s665 = scalar_select %p664, %s28, 1
      %s666 = smul.addr %s665, 4
      %s667 = smul.addr %s666, 4
      %s668 = scalar_lea.vmem %s11, %s667
      %p669 = scmp.lt.s32.totalorder %s28, 1
      %s670 = scalar_select %p669, %s28, 1
      %s671 = scalar_lea.vmem %s12, %s670
      %p672 = scmp.lt.s32.totalorder %s28, 1
      %s673 = scalar_select %p672, %s28, 1
      %s674 = smul.addr %s673, 16
      %s675 = smul.addr %s674, 4
      %s676 = scalar_lea.vmem %s13, %s675
      %p677 = scmp.lt.s32.totalorder %s28, 1
      %s678 = scalar_select %p677, %s28, 1
      %s679 = scalar_lea.vmem %s14, %s678
      %p681 = scmp.eq.s32.totalorder %s28, 0
      // Predicated region
      $region85: #{sapiens_wrapper_forward.3} parent=83 // pred_check
        %p682 = pneg %p681
      $region86: #{sapiens_wrapper_forward.3} parent=83 // pred_check_branch
        %684 = sbr.rel (%p682) target = $region88
      $region87: #{sapiens_wrapper_forward.3} parent=83 // pred_region
        %p686 = scmp.lt.u32.totalorder 10, 8
        %p687 = pneg %p686
        // Predicated region
        $region89: #{sapiens_wrapper_forward.3} parent=87 // pred_check
          _
        $region90: #{sapiens_wrapper_forward.3} parent=87 // pred_check_branch
          %689 = sbr.rel (%p686) target = $region92
        $region91: #{sapiens_wrapper_forward.3} parent=87 // pred_region
          %s704 = sand.u32 10, 7
          %p705 = scmp.eq.s32.totalorder %s704, 0
          %p706 = pneg %p705
          // Predicated region
          $region104: #{sapiens_wrapper_forward.3} parent=91 // pred_check
            _
          $region105: #{sapiens_wrapper_forward.3} parent=91 // pred_check_branch
            %708 = sbr.rel (%p705) target = $region107
          $region106: #{sapiens_wrapper_forward.3} parent=91 // pred_region
            %s709 = sand.u32 10, 7
            %s710 = ssub.s32 10, %s709
            %s711 = scalar_lea.vmem %s0, %s710
            %s712 = ssub.s32 10, %s709
            %s713 = scalar_lea.vmem %s17, %s712
            loop: start=0, step=1, limit=1
            $region108: #{sapiens_wrapper_forward.3} parent=106 // loop_pre_header
              _
            $region109: #{sapiens_wrapper_forward.3} parent=106 // loop_header
              %s715 = sphi 0, %s719
              %p716 = scmp.ge.s32.totalorder %s715, 1
              %s720 = sphi %s0, %s0
              %s721 = sphi %s17, %s17
            $region110: #{sapiens_wrapper_forward.3} parent=106 // loop_header_branch
              %718 = sbr.rel (%p716) target = $region114
            $region111: #{sapiens_wrapper_forward.3} parent=106 // loop_body
              %v722 = vld [vmem:[%s720] sm:$0xff]
              %723 = vst [vmem:[%s721] sm:$0xff] %v722
            $region112: #{sapiens_wrapper_forward.3} parent=106 // loop_footer
              %s719 = sadd.s32 1, %s715
            $region113: #{sapiens_wrapper_forward.3} parent=106 // loop_footer_branch
              %714 = sbr.rel target = $region109
            $region114: #{sapiens_wrapper_forward.3} parent=106 // loop_exit
              _
            %s724 = sshllo.u32 0, %s709
            loop: start=0, step=1, limit=1
            $region115: #{sapiens_wrapper_forward.3} parent=106 // loop_pre_header
              _
            $region116: #{sapiens_wrapper_forward.3} parent=106 // loop_header
              %s726 = sphi 0, %s730
              %p727 = scmp.ge.s32.totalorder %s726, 1
              %s731 = sphi %s711, %s711
              %s732 = sphi %s713, %s713
            $region117: #{sapiens_wrapper_forward.3} parent=106 // loop_header_branch
              %729 = sbr.rel (%p727) target = $region121
            $region118: #{sapiens_wrapper_forward.3} parent=106 // loop_body
              %v733 = vld [vmem:[%s731] sm:%s724]
              %734 = vst [vmem:[%s732] sm:%s724] %v733
            $region119: #{sapiens_wrapper_forward.3} parent=106 // loop_footer
              %s730 = sadd.s32 1, %s726
            $region120: #{sapiens_wrapper_forward.3} parent=106 // loop_footer_branch
              %725 = sbr.rel target = $region116
            $region121: #{sapiens_wrapper_forward.3} parent=106 // loop_exit
              _
          $region107: #{sapiens_wrapper_forward.3} parent=91 // pred_fallthru
            _
        $region92: #{sapiens_wrapper_forward.3} parent=87 // pred_fallthru
          _
        // Predicated region
        $region93: #{sapiens_wrapper_forward.3} parent=87 // pred_check
          %p690 = pneg %p686
        $region94: #{sapiens_wrapper_forward.3} parent=87 // pred_check_branch
          %692 = sbr.rel (%p690) target = $region96
        $region95: #{sapiens_wrapper_forward.3} parent=87 // pred_region
          %s693 = sshllo.u32 0, 10
          loop: start=0, step=1, limit=1
          $region97: #{sapiens_wrapper_forward.3} parent=95 // loop_pre_header
            _
          $region98: #{sapiens_wrapper_forward.3} parent=95 // loop_header
            %s695 = sphi 0, %s699
            %p696 = scmp.ge.s32.totalorder %s695, 1
            %s700 = sphi %s0, %s0
            %s701 = sphi %s17, %s17
          $region99: #{sapiens_wrapper_forward.3} parent=95 // loop_header_branch
            %698 = sbr.rel (%p696) target = $region103
          $region100: #{sapiens_wrapper_forward.3} parent=95 // loop_body
            %v702 = vld [vmem:[%s700] sm:%s693]
            %703 = vst [vmem:[%s701] sm:%s693] %v702
          $region101: #{sapiens_wrapper_forward.3} parent=95 // loop_footer
            %s699 = sadd.s32 1, %s695
          $region102: #{sapiens_wrapper_forward.3} parent=95 // loop_footer_branch
            %694 = sbr.rel target = $region98
          $region103: #{sapiens_wrapper_forward.3} parent=95 // loop_exit
            _
        $region96: #{sapiens_wrapper_forward.3} parent=87 // pred_fallthru
          _
        // Predicated region
        $region122: #{sapiens_wrapper_forward.3} parent=87 // pred_check
          _
        $region123: #{sapiens_wrapper_forward.3} parent=87 // pred_check_branch
          %737 = sbr.rel (0) target = $region125
        $region124: #{sapiens_wrapper_forward.3} parent=87 // pred_region
          %738 = vsyncadd [#allocation2], 160
        $region125: #{sapiens_wrapper_forward.3} parent=87 // pred_fallthru
          _
        %s739 = smul.u32 10, 1
        %s740 = sshll.u32 %s739, 4
        %741 = dma.done [#allocation2], %s740
      $region88: #{sapiens_wrapper_forward.3} parent=83 // pred_fallthru
        _
      %v742 = vld [vmem:[%s17] sm:$0xff]
      %v743 = vld [vmem:[%s17 + $0x8] sm:$0x3]
      %v744 = vld [vmem:[%s1] sm:$0xff]
      %v745 = vld [vmem:[%s1 + $0x8] sm:$0x3]
      %v746 = vld [vmem:[%s2] sm:$0x1]
      %747 = vset.pattern.permute.xlu0 0
      %748 = vperm.xlu0 %747, %v744
      %v749 = vpop.permute.xlu0 %748
      %750 = vset.pattern.permute.xlu0 0
      %751 = vperm.xlu0 %750, %v745
      %v752 = vpop.permute.xlu0 %751
      %v753 = vlaneseq
      %v754 = vshrl.u32 %v753, 7
      %v755 = vsub.s32 0, %v754
      %v756 = vrot.slane %v746, %v755
      %vm757 = vcmp.eq.s32.totalorder %v749, %v756
      %vm758 = vcmp.eq.s32.totalorder %v752, %v756
      %v759 = vld [vmem:[%s638] sm:$0x1]
      %v760 = vld [vmem:[%s641] sm:$0x1]
      %vm761 = vcmask 261120
      %v762 = vsel %vm761, %v742, 0.0
      %763 = vadd.xlane.f32.xlu0 %v762
      %v764 = vpop.xlane.xlu0 %763
      %vm765 = vcmask 254976
      %v766 = vsel %vm765, %v743, 0.0
      %767 = vadd.xlane.f32.xlu0 %v766
      %v768 = vpop.xlane.xlu0 %767
      %v769 = vrcp.pop 32.0
      %v770 = vmul.f32 %v764, %v769
      %v771 = vmul.f32 %v768, %v769
      %v772 = vsub.f32 %v742, %v770
      %v773 = vsub.f32 %v743, %v771
      %v774 = vmul.f32 %v772, %v772
      %v775 = vmul.f32 %v773, %v773
      %v776 = vsel %vm761, %v774, 0.0
      %777 = vadd.xlane.f32.xlu0 %v776
      %v778 = vpop.xlane.xlu0 %777
      %v779 = vsel %vm765, %v775, 0.0
      %780 = vadd.xlane.f32.xlu0 %v779
      %v781 = vpop.xlane.xlu0 %780
      %v782 = vmul.f32 %v778, %v769
      %v783 = vmul.f32 %v781, %v769
      %v784 = vadd.f32 %v782, 1e-06
      %v785 = vadd.f32 %v783, 1e-06
      %v786 = vrsqrt.pop %v784
      %v787 = vrsqrt.pop %v785
      %v788 = vmul.f32 %v772, %v786
      %v789 = vmul.f32 %v773, %v787
      %v791 = vlaneseq
      %v792 = vshrl.u32 %v791, 7
      %v793 = vsub.s32 0, %v792
      %v794 = vrot.slane %v759, %v793
      %v796 = vmul.f32 %v788, %v794
      %v797 = vmul.f32 %v789, %v794
      %v799 = vlaneseq
      %v800 = vshrl.u32 %v799, 7
      %v801 = vsub.s32 0, %v800
      %v802 = vrot.slane %v760, %v801
      %v804 = vadd.f32 %v796, %v802
      %v805 = vadd.f32 %v797, %v802
      %v806 = vpack.c.bf16 %v805, %v804
      %v807 = vld [vmem:[%s646] sm:$0xf]
      %v808 = vld [vmem:[%s646 + $0x4] sm:$0xf]
      %v809 = vld [vmem:[%s646 + $0x8] sm:$0xf]
      %v810 = vld [vmem:[%s646 + $0xc] sm:$0xf]
      %v811 = vld [vmem:[%s649] sm:$0x1]
      %v813 = vlaneseq
      %v814 = vshrl.u32 %v813, 7
      %v815 = vsub.s32 0, %v814
      %v816 = vrot.slane %v811, %v815
      %v822 = vunpack.c.l.b16 %v807
      %v823 = vunpack.c.l.b16 %v808
      %v824 = vunpack.c.l.b16 %v809
      %v825 = vunpack.c.l.b16 %v810
      %v826 = vpack.c.b16 %v823, %v822
      %v827 = vpack.c.b16 %v825, %v824
      %v831 = vsel %vm761, %v806, 0
      %833 = vmatprep.subr.bf16.mxu0 0
      %834 = vmatpush1.bf16.msra.mxu0 %v826
      %835 = vmatprep.subr.bf16.mxu0 0
      %836 = vmatpush1.bf16.msra.mxu0 %v827
      %837 = vmatprep.subr.bf16.mxu0 0
      %838 = vmatpush1.bf16.msra.mxu0 0
      %839 = vmatprep.subr.bf16.mxu0 0
      %840 = vmatpush1.bf16.msra.mxu0 0
      %841 = vmatprep.subr.bf16.mxu0 0
      %842 = vmatpush1.bf16.msra.mxu0 0
      %843 = vmatprep.subr.bf16.mxu0 0
      %844 = vmatpush1.bf16.msra.mxu0 0
      %845 = vmatprep.subr.bf16.mxu0 0
      %846 = vmatpush1.bf16.msra.mxu0 0
      %847 = vmatprep.subr.bf16.mxu0 0
      %848 = vmatpush1.bf16.msra.mxu0 0
      %849 = vmatprep.subr.bf16.mxu0 0
      %850 = vmatpush1.bf16.msra.mxu0 0
      %851 = vmatprep.subr.bf16.mxu0 0
      %852 = vmatpush1.bf16.msra.mxu0 0
      %853 = vmatprep.subr.bf16.mxu0 0
      %854 = vmatpush1.bf16.msra.mxu0 0
      %855 = vmatprep.subr.bf16.mxu0 0
      %856 = vmatpush1.bf16.msra.mxu0 0
      %857 = vmatprep.subr.bf16.mxu0 0
      %858 = vmatpush1.bf16.msra.mxu0 0
      %859 = vmatprep.subr.bf16.mxu0 0
      %860 = vmatpush1.bf16.msra.mxu0 0
      %861 = vmatprep.subr.bf16.mxu0 0
      %862 = vmatpush1.bf16.msra.mxu0 0
      %863 = vmatprep.subr.bf16.mxu0 0
      %864 = vmatpush1.bf16.msra.mxu0 0
      %865 = vmatprep.mubr.bf16.mxu0 0
      %866 = vmatmul.mubr.bf16.gmra.mrb[0].mxu0 %v831
      %v867 = vpop.f32.mrb[0].mxu0
      %v868 = vadd.f32 %v816, %v867
      %v869 = vpop.f32.mrb[0].mxu0
      %v870 = vpop.f32.mrb[0].mxu0
      %v871 = vadd.f32 %v816, %v870
      %v872 = vpop.f32.mrb[0].mxu0
      %873 = vdwg.mxu0
      %v874 = vpack.c.bf16 %v871, %v868
      %876 = vrot.lane.b32.xlu0 %v874, 96
      %v877 = vpop.permute.xlu0 %876
      %vm878 = vcmask 64512
      %v880 = vsel %vm878, %v874, 0
      %v883 = vsel %vm878, %v877, 0
      %885 = vmatprep.subr.bf16.mxu0 0
      %886 = vmatpush1.bf16.xpose.msra.mxu0 %v883
      %887 = vmatprep.subr.bf16.mxu0 0
      %888 = vmatpush1.bf16.xpose.msra.mxu0 0
      %889 = vmatprep.subr.bf16.mxu0 0
      %890 = vmatpush1.bf16.xpose.msra.mxu0 0
      %891 = vmatprep.subr.bf16.mxu0 0
      %892 = vmatpush1.bf16.xpose.msra.mxu0 0
      %893 = vmatprep.subr.bf16.mxu0 0
      %894 = vmatpush1.bf16.xpose.msra.mxu0 0
      %895 = vmatprep.subr.bf16.mxu0 0
      %896 = vmatpush1.bf16.xpose.msra.mxu0 0
      %897 = vmatprep.subr.bf16.mxu0 0
      %898 = vmatpush1.bf16.xpose.msra.mxu0 0
      %899 = vmatprep.subr.bf16.mxu0 0
      %900 = vmatpush1.bf16.xpose.msra.mxu0 0
      %901 = vmatprep.subr.bf16.mxu0 0
      %902 = vmatpush1.bf16.xpose.msra.mxu0 0
      %903 = vmatprep.subr.bf16.mxu0 0
      %904 = vmatpush1.bf16.xpose.msra.mxu0 0
      %905 = vmatprep.subr.bf16.mxu0 0
      %906 = vmatpush1.bf16.xpose.msra.mxu0 0
      %907 = vmatprep.subr.bf16.mxu0 0
      %908 = vmatpush1.bf16.xpose.msra.mxu0 0
      %909 = vmatprep.subr.bf16.mxu0 0
      %910 = vmatpush1.bf16.xpose.msra.mxu0 0
      %911 = vmatprep.subr.bf16.mxu0 0
      %912 = vmatpush1.bf16.xpose.msra.mxu0 0
      %913 = vmatprep.subr.bf16.mxu0 0
      %914 = vmatpush1.bf16.xpose.msra.mxu0 0
      %915 = vmatprep.subr.bf16.mxu0 0
      %916 = vmatpush1.bf16.xpose.msra.mxu0 0
      %917 = vmatprep.mubr.bf16.mxu0 0
      %918 = vmatmul.mubr.bf16.gmra.mrb[0].mxu0 %v880
      %v919 = vpop.f32.mrb[0].mxu0
      %v920 = vadd.f32 0.0, %v919
      %v921 = vpop.f32.mrb[0].mxu0
      %v922 = vpop.f32.mrb[0].mxu0
      %v923 = vadd.f32 0.0, %v922
      %v924 = vpop.f32.mrb[0].mxu0
      %925 = vdwg.mxu0
      %v926 = vmul.f32 %v920, 0.35355338
      %v927 = vmul.f32 %v923, 0.35355338
      %v928 = vsel %vm757, %v926, -1e+30
      %v929 = vsel %vm758, %v927, -1e+30
      %vm930 = vcmask 80896
      %v931 = vsel %vm930, %v928, -inf
      %932 = vmax.xlane.f32.xlu0 %v931
      %v933 = vpop.xlane.xlu0 %932
      %vm934 = vcmask 74752
      %v935 = vsel %vm934, %v929, -inf
      %936 = vmax.xlane.f32.xlu0 %v935
      %v937 = vpop.xlane.xlu0 %936
      %v938 = vsub.f32 %v928, %v933
      %v939 = vsub.f32 %v929, %v937
      %v940 = vmul.f32 %v938, 1.442695
      %v941 = vpow.pop %v940
      %v942 = vmul.f32 %v939, 1.442695
      %v943 = vpow.pop %v942
      %v944 = vsel %vm930, %v941, 0.0
      %945 = vadd.xlane.f32.xlu0 %v944
      %v946 = vpop.xlane.xlu0 %945
      %v947 = vsel %vm934, %v943, 0.0
      %948 = vadd.xlane.f32.xlu0 %v947
      %v949 = vpop.xlane.xlu0 %948
      %v950 = vrcp.pop %v946
      %v951 = vrcp.pop %v949
      %v952 = vmul.f32 %v941, %v950
      %v953 = vmul.f32 %v943, %v951
      %v954 = vpack.c.bf16 %v953, %v952
      %955 = vrot.lane.b32.xlu0 %v874, 64
      %v956 = vpop.permute.xlu0 %955
      %v958 = vsel %vm930, %v954, 0
      %vm960 = vcmask 1044480
      %v962 = vsel %vm960, %v956, 0
      %964 = vmatprep.subr.bf16.mxu0 0
      %965 = vmatpush1.bf16.msra.mxu0 %v962
      %966 = vmatprep.subr.bf16.mxu0 0
      %967 = vmatpush1.bf16.msra.mxu0 0
      %968 = vmatprep.subr.bf16.mxu0 0
      %969 = vmatpush1.bf16.msra.mxu0 0
      %970 = vmatprep.subr.bf16.mxu0 0
      %971 = vmatpush1.bf16.msra.mxu0 0
      %972 = vmatprep.subr.bf16.mxu0 0
      %973 = vmatpush1.bf16.msra.mxu0 0
      %974 = vmatprep.subr.bf16.mxu0 0
      %975 = vmatpush1.bf16.msra.mxu0 0
      %976 = vmatprep.subr.bf16.mxu0 0
      %977 = vmatpush1.bf16.msra.mxu0 0
      %978 = vmatprep.subr.bf16.mxu0 0
      %979 = vmatpush1.bf16.msra.mxu0 0
      %980 = vmatprep.subr.bf16.mxu0 0
      %981 = vmatpush1.bf16.msra.mxu0 0
      %982 = vmatprep.subr.bf16.mxu0 0
      %983 = vmatpush1.bf16.msra.mxu0 0
      %984 = vmatprep.subr.bf16.mxu0 0
      %985 = vmatpush1.bf16.msra.mxu0 0
      %986 = vmatprep.subr.bf16.mxu0 0
      %987 = vmatpush1.bf16.msra.mxu0 0
      %988 = vmatprep.subr.bf16.mxu0 0
      %989 = vmatpush1.bf16.msra.mxu0 0
      %990 = vmatprep.subr.bf16.mxu0 0
      %991 = vmatpush1.bf16.msra.mxu0 0
      %992 = vmatprep.subr.bf16.mxu0 0
      %993 = vmatpush1.bf16.msra.mxu0 0
      %994 = vmatprep.subr.bf16.mxu0 0
      %995 = vmatpush1.bf16.msra.mxu0 0
      %996 = vmatprep.mubr.bf16.mxu0 0
      %997 = vmatmul.mubr.bf16.gmra.mrb[0].mxu0 %v958
      %v998 = vpop.f32.mrb[0].mxu0
      %v999 = vadd.f32 0.0, %v998
      %v1000 = vpop.f32.mrb[0].mxu0
      %v1001 = vpop.f32.mrb[0].mxu0
      %v1002 = vadd.f32 0.0, %v1001
      %v1003 = vpop.f32.mrb[0].mxu0
      %1004 = vdwg.mxu0
      %1005 = vrot.lane.b32.xlu0 %v874, 120
      %v1006 = vpop.permute.xlu0 %1005
      %1007 = vrot.lane.b32.xlu0 %v874, 88
      %v1008 = vpop.permute.xlu0 %1007
      %v1010 = vsel %vm878, %v1006, 0
      %v1013 = vsel %vm878, %v1008, 0
      %1015 = vmatprep.subr.bf16.mxu0 0
      %1016 = vmatpush1.bf16.xpose.msra.mxu0 %v1013
      %1017 = vmatprep.subr.bf16.mxu0 0
      %1018 = vmatpush1.bf16.xpose.msra.mxu0 0
      %1019 = vmatprep.subr.bf16.mxu0 0
      %1020 = vmatpush1.bf16.xpose.msra.mxu0 0
      %1021 = vmatprep.subr.bf16.mxu0 0
      %1022 = vmatpush1.bf16.xpose.msra.mxu0 0
      %1023 = vmatprep.subr.bf16.mxu0 0
      %1024 = vmatpush1.bf16.xpose.msra.mxu0 0
      %1025 = vmatprep.subr.bf16.mxu0 0
      %1026 = vmatpush1.bf16.xpose.msra.mxu0 0
      %1027 = vmatprep.subr.bf16.mxu0 0
      %1028 = vmatpush1.bf16.xpose.msra.mxu0 0
      %1029 = vmatprep.subr.bf16.mxu0 0
      %1030 = vmatpush1.bf16.xpose.msra.mxu0 0
      %1031 = vmatprep.subr.bf16.mxu0 0
      %1032 = vmatpush1.bf16.xpose.msra.mxu0 0
      %1033 = vmatprep.subr.bf16.mxu0 0
      %1034 = vmatpush1.bf16.xpose.msra.mxu0 0
      %1035 = vmatprep.subr.bf16.mxu0 0
      %1036 = vmatpush1.bf16.xpose.msra.mxu0 0
      %1037 = vmatprep.subr.bf16.mxu0 0
      %1038 = vmatpush1.bf16.xpose.msra.mxu0 0
      %1039 = vmatprep.subr.bf16.mxu0 0
      %1040 = vmatpush1.bf16.xpose.msra.mxu0 0
      %1041 = vmatprep.subr.bf16.mxu0 0
      %1042 = vmatpush1.bf16.xpose.msra.mxu0 0
      %1043 = vmatprep.subr.bf16.mxu0 0
      %1044 = vmatpush1.bf16.xpose.msra.mxu0 0
      %1045 = vmatprep.subr.bf16.mxu0 0
      %1046 = vmatpush1.bf16.xpose.msra.mxu0 0
      %1047 = vmatprep.mubr.bf16.mxu0 0
      %1048 = vmatmul.mubr.bf16.gmra.mrb[0].mxu0 %v1010
      %v1049 = vpop.f32.mrb[0].mxu0
      %v1050 = vadd.f32 0.0, %v1049
      %v1051 = vpop.f32.mrb[0].mxu0
      %v1052 = vpop.f32.mrb[0].mxu0
      %v1053 = vadd.f32 0.0, %v1052
      %v1054 = vpop.f32.mrb[0].mxu0
      %1055 = vdwg.mxu0
      %v1056 = vmul.f32 %v1050, 0.35355338
      %v1057 = vmul.f32 %v1053, 0.35355338
      %v1058 = vsel %vm757, %v1056, -1e+30
      %v1059 = vsel %vm758, %v1057, -1e+30
      %v1060 = vsel %vm930, %v1058, -inf
      %1061 = vmax.xlane.f32.xlu0 %v1060
      %v1062 = vpop.xlane.xlu0 %1061
      %v1063 = vsel %vm934, %v1059, -inf
      %1064 = vmax.xlane.f32.xlu0 %v1063
      %v1065 = vpop.xlane.xlu0 %1064
      %v1066 = vsub.f32 %v1058, %v1062
      %v1067 = vsub.f32 %v1059, %v1065
      %v1068 = vmul.f32 %v1066, 1.442695
      %v1069 = vpow.pop %v1068
      %v1070 = vmul.f32 %v1067, 1.442695
      %v1071 = vpow.pop %v1070
      %v1072 = vsel %vm930, %v1069, 0.0
      %1073 = vadd.xlane.f32.xlu0 %v1072
      %v1074 = vpop.xlane.xlu0 %1073
      %v1075 = vsel %vm934, %v1071, 0.0
      %1076 = vadd.xlane.f32.xlu0 %v1075
      %v1077 = vpop.xlane.xlu0 %1076
      %v1078 = vrcp.pop %v1074
      %v1079 = vrcp.pop %v1077
      %v1080 = vmul.f32 %v1069, %v1078
      %v1081 = vmul.f32 %v1071, %v1079
      %v1082 = vpack.c.bf16 %v1081, %v1080
      %1083 = vrot.lane.b32.xlu0 %v874, 56
      %v1084 = vpop.permute.xlu0 %1083
      %v1086 = vsel %vm930, %v1082, 0
      %v1089 = vsel %vm960, %v1084, 0
      %1091 = vmatprep.subr.bf16.mxu0 0
      %1092 = vmatpush1.bf16.msra.mxu0 %v1089
      %1093 = vmatprep.subr.bf16.mxu0 0
      %1094 = vmatpush1.bf16.msra.mxu0 0
      %1095 = vmatprep.subr.bf16.mxu0 0
      %1096 = vmatpush1.bf16.msra.mxu0 0
      %1097 = vmatprep.subr.bf16.mxu0 0
      %1098 = vmatpush1.bf16.msra.mxu0 0
      %1099 = vmatprep.subr.bf16.mxu0 0
      %1100 = vmatpush1.bf16.msra.mxu0 0
      %1101 = vmatprep.subr.bf16.mxu0 0
      %1102 = vmatpush1.bf16.msra.mxu0 0
      %1103 = vmatprep.subr.bf16.mxu0 0
      %1104 = vmatpush1.bf16.msra.mxu0 0
      %1105 = vmatprep.subr.bf16.mxu0 0
      %1106 = vmatpush1.bf16.msra.mxu0 0
      %1107 = vmatprep.subr.bf16.mxu0 0
      %1108 = vmatpush1.bf16.msra.mxu0 0
      %1109 = vmatprep.subr.bf16.mxu0 0
      %1110 = vmatpush1.bf16.msra.mxu0 0
      %1111 = vmatprep.subr.bf16.mxu0 0
      %1112 = vmatpush1.bf16.msra.mxu0 0
      %1113 = vmatprep.subr.bf16.mxu0 0
      %1114 = vmatpush1.bf16.msra.mxu0 0
      %1115 = vmatprep.subr.bf16.mxu0 0
      %1116 = vmatpush1.bf16.msra.mxu0 0
      %1117 = vmatprep.subr.bf16.mxu0 0
      %1118 = vmatpush1.bf16.msra.mxu0 0
      %1119 = vmatprep.subr.bf16.mxu0 0
      %1120 = vmatpush1.bf16.msra.mxu0 0
      %1121 = vmatprep.subr.bf16.mxu0 0
      %1122 = vmatpush1.bf16.msra.mxu0 0
      %1123 = vmatprep.mubr.bf16.mxu0 0
      %1124 = vmatmul.mubr.bf16.gmra.mrb[0].mxu0 %v1086
      %v1125 = vpop.f32.mrb[0].mxu0
      %v1126 = vadd.f32 0.0, %v1125
      %v1127 = vpop.f32.mrb[0].mxu0
      %v1128 = vpop.f32.mrb[0].mxu0
      %v1129 = vadd.f32 0.0, %v1128
      %v1130 = vpop.f32.mrb[0].mxu0
      %1131 = vdwg.mxu0
      %1132 = vrot.lane.b32.xlu0 %v874, 112
      %v1133 = vpop.permute.xlu0 %1132
      %1134 = vrot.lane.b32.xlu0 %v874, 80
      %v1135 = vpop.permute.xlu0 %1134
      %v1137 = vsel %vm878, %v1133, 0
      %v1140 = vsel %vm878, %v1135, 0
      %1142 = vmatprep.subr.bf16.mxu0 0
      %1143 = vmatpush1.bf16.xpose.msra.mxu0 %v1140
      %1144 = vmatprep.subr.bf16.mxu0 0
      %1145 = vmatpush1.bf16.xpose.msra.mxu0 0
      %1146 = vmatprep.subr.bf16.mxu0 0
      %1147 = vmatpush1.bf16.xpose.msra.mxu0 0
      %1148 = vmatprep.subr.bf16.mxu0 0
      %1149 = vmatpush1.bf16.xpose.msra.mxu0 0
      %1150 = vmatprep.subr.bf16.mxu0 0
      %1151 = vmatpush1.bf16.xpose.msra.mxu0 0
      %1152 = vmatprep.subr.bf16.mxu0 0
      %1153 = vmatpush1.bf16.xpose.msra.mxu0 0
      %1154 = vmatprep.subr.bf16.mxu0 0
      %1155 = vmatpush1.bf16.xpose.msra.mxu0 0
      %1156 = vmatprep.subr.bf16.mxu0 0
      %1157 = vmatpush1.bf16.xpose.msra.mxu0 0
      %1158 = vmatprep.subr.bf16.mxu0 0
      %1159 = vmatpush1.bf16.xpose.msra.mxu0 0
      %1160 = vmatprep.subr.bf16.mxu0 0
      %1161 = vmatpush1.bf16.xpose.msra.mxu0 0
      %1162 = vmatprep.subr.bf16.mxu0 0
      %1163 = vmatpush1.bf16.xpose.msra.mxu0 0
      %1164 = vmatprep.subr.bf16.mxu0 0
      %1165 = vmatpush1.bf16.xpose.msra.mxu0 0
      %1166 = vmatprep.subr.bf16.mxu0 0
      %1167 = vmatpush1.bf16.xpose.msra.mxu0 0
      %1168 = vmatprep.subr.bf16.mxu0 0
      %1169 = vmatpush1.bf16.xpose.msra.mxu0 0
      %1170 = vmatprep.subr.bf16.mxu0 0
      %1171 = vmatpush1.bf16.xpose.msra.mxu0 0
      %1172 = vmatprep.subr.bf16.mxu0 0
      %1173 = vmatpush1.bf16.xpose.msra.mxu0 0
      %1174 = vmatprep.mubr.bf16.mxu0 0
      %1175 = vmatmul.mubr.bf16.gmra.mrb[0].mxu0 %v1137
      %v1176 = vpop.f32.mrb[0].mxu0
      %v1177 = vadd.f32 0.0, %v1176
      %v1178 = vpop.f32.mrb[0].mxu0
      %v1179 = vpop.f32.mrb[0].mxu0
      %v1180 = vadd.f32 0.0, %v1179
      %v1181 = vpop.f32.mrb[0].mxu0
      %1182 = vdwg.mxu0
      %v1183 = vmul.f32 %v1177, 0.35355338
      %v1184 = vmul.f32 %v1180, 0.35355338
      %v1185 = vsel %vm757, %v1183, -1e+30
      %v1186 = vsel %vm758, %v1184, -1e+30
      %v1187 = vsel %vm930, %v1185, -inf
      %1188 = vmax.xlane.f32.xlu0 %v1187
      %v1189 = vpop.xlane.xlu0 %1188
      %v1190 = vsel %vm934, %v1186, -inf
      %1191 = vmax.xlane.f32.xlu0 %v1190
      %v1192 = vpop.xlane.xlu0 %1191
      %v1193 = vsub.f32 %v1185, %v1189
      %v1194 = vsub.f32 %v1186, %v1192
      %v1195 = vmul.f32 %v1193, 1.442695
      %v1196 = vpow.pop %v1195
      %v1197 = vmul.f32 %v1194, 1.442695
      %v1198 = vpow.pop %v1197
      %v1199 = vsel %vm930, %v1196, 0.0
      %1200 = vadd.xlane.f32.xlu0 %v1199
      %v1201 = vpop.xlane.xlu0 %1200
      %v1202 = vsel %vm934, %v1198, 0.0
      %1203 = vadd.xlane.f32.xlu0 %v1202
      %v1204 = vpop.xlane.xlu0 %1203
      %v1205 = vrcp.pop %v1201
      %v1206 = vrcp.pop %v1204
      %v1207 = vmul.f32 %v1196, %v1205
      %v1208 = vmul.f32 %v1198, %v1206
      %v1209 = vpack.c.bf16 %v1208, %v1207
      %1210 = vrot.lane.b32.xlu0 %v874, 48
      %v1211 = vpop.permute.xlu0 %1210
      %v1213 = vsel %vm930, %v1209, 0
      %v1216 = vsel %vm960, %v1211, 0
      %1218 = vmatprep.subr.bf16.mxu0 0
      %1219 = vmatpush1.bf16.msra.mxu0 %v1216
      %1220 = vmatprep.subr.bf16.mxu0 0
      %1221 = vmatpush1.bf16.msra.mxu0 0
      %1222 = vmatprep.subr.bf16.mxu0 0
      %1223 = vmatpush1.bf16.msra.mxu0 0
      %1224 = vmatprep.subr.bf16.mxu0 0
      %1225 = vmatpush1.bf16.msra.mxu0 0
      %1226 = vmatprep.subr.bf16.mxu0 0
      %1227 = vmatpush1.bf16.msra.mxu0 0
      %1228 = vmatprep.subr.bf16.mxu0 0
      %1229 = vmatpush1.bf16.msra.mxu0 0
      %1230 = vmatprep.subr.bf16.mxu0 0
      %1231 = vmatpush1.bf16.msra.mxu0 0
      %1232 = vmatprep.subr.bf16.mxu0 0
      %1233 = vmatpush1.bf16.msra.mxu0 0
      %1234 = vmatprep.subr.bf16.mxu0 0
      %1235 = vmatpush1.bf16.msra.mxu0 0
      %1236 = vmatprep.subr.bf16.mxu0 0
      %1237 = vmatpush1.bf16.msra.mxu0 0
      %1238 = vmatprep.subr.bf16.mxu0 0
      %1239 = vmatpush1.bf16.msra.mxu0 0
      %1240 = vmatprep.subr.bf16.mxu0 0
      %1241 = vmatpush1.bf16.msra.mxu0 0
      %1242 = vmatprep.subr.bf16.mxu0 0
      %1243 = vmatpush1.bf16.msra.mxu0 0
      %1244 = vmatprep.subr.bf16.mxu0 0
      %1245 = vmatpush1.bf16.msra.mxu0 0
      %1246 = vmatprep.subr.bf16.mxu0 0
      %1247 = vmatpush1.bf16.msra.mxu0 0
      %1248 = vmatprep.subr.bf16.mxu0 0
      %1249 = vmatpush1.bf16.msra.mxu0 0
      %1250 = vmatprep.mubr.bf16.mxu0 0
      %1251 = vmatmul.mubr.bf16.gmra.mrb[0].mxu0 %v1213
      %v1252 = vpop.f32.mrb[0].mxu0
      %v1253 = vadd.f32 0.0, %v1252
      %v1254 = vpop.f32.mrb[0].mxu0
      %v1255 = vpop.f32.mrb[0].mxu0
      %v1256 = vadd.f32 0.0, %v1255
      %v1257 = vpop.f32.mrb[0].mxu0
      %1258 = vdwg.mxu0
      %1259 = vrot.lane.b32.xlu0 %v874, 104
      %v1260 = vpop.permute.xlu0 %1259
      %1261 = vrot.lane.b32.xlu0 %v874, 72
      %v1262 = vpop.permute.xlu0 %1261
      %v1264 = vsel %vm878, %v1260, 0
      %v1267 = vsel %vm878, %v1262, 0
      %1269 = vmatprep.subr.bf16.mxu0 0
      %1270 = vmatpush1.bf16.xpose.msra.mxu0 %v1267
      %1271 = vmatprep.subr.bf16.mxu0 0
      %1272 = vmatpush1.bf16.xpose.msra.mxu0 0
      %1273 = vmatprep.subr.bf16.mxu0 0
      %1274 = vmatpush1.bf16.xpose.msra.mxu0 0
      %1275 = vmatprep.subr.bf16.mxu0 0
      %1276 = vmatpush1.bf16.xpose.msra.mxu0 0
      %1277 = vmatprep.subr.bf16.mxu0 0
      %1278 = vmatpush1.bf16.xpose.msra.mxu0 0
      %1279 = vmatprep.subr.bf16.mxu0 0
      %1280 = vmatpush1.bf16.xpose.msra.mxu0 0
      %1281 = vmatprep.subr.bf16.mxu0 0
      %1282 = vmatpush1.bf16.xpose.msra.mxu0 0
      %1283 = vmatprep.subr.bf16.mxu0 0
      %1284 = vmatpush1.bf16.xpose.msra.mxu0 0
      %1285 = vmatprep.subr.bf16.mxu0 0
      %1286 = vmatpush1.bf16.xpose.msra.mxu0 0
      %1287 = vmatprep.subr.bf16.mxu0 0
      %1288 = vmatpush1.bf16.xpose.msra.mxu0 0
      %1289 = vmatprep.subr.bf16.mxu0 0
      %1290 = vmatpush1.bf16.xpose.msra.mxu0 0
      %1291 = vmatprep.subr.bf16.mxu0 0
      %1292 = vmatpush1.bf16.xpose.msra.mxu0 0
      %1293 = vmatprep.subr.bf16.mxu0 0
      %1294 = vmatpush1.bf16.xpose.msra.mxu0 0
      %1295 = vmatprep.subr.bf16.mxu0 0
      %1296 = vmatpush1.bf16.xpose.msra.mxu0 0
      %1297 = vmatprep.subr.bf16.mxu0 0
      %1298 = vmatpush1.bf16.xpose.msra.mxu0 0
      %1299 = vmatprep.subr.bf16.mxu0 0
      %1300 = vmatpush1.bf16.xpose.msra.mxu0 0
      %1301 = vmatprep.mubr.bf16.mxu0 0
      %1302 = vmatmul.mubr.bf16.gmra.mrb[0].mxu0 %v1264
      %v1303 = vpop.f32.mrb[0].mxu0
      %v1304 = vadd.f32 0.0, %v1303
      %v1305 = vpop.f32.mrb[0].mxu0
      %v1306 = vpop.f32.mrb[0].mxu0
      %v1307 = vadd.f32 0.0, %v1306
      %v1308 = vpop.f32.mrb[0].mxu0
      %1309 = vdwg.mxu0
      %v1310 = vmul.f32 %v1304, 0.35355338
      %v1311 = vmul.f32 %v1307, 0.35355338
      %v1312 = vsel %vm757, %v1310, -1e+30
      %v1313 = vsel %vm758, %v1311, -1e+30
      %v1314 = vsel %vm930, %v1312, -inf
      %1315 = vmax.xlane.f32.xlu0 %v1314
      %v1316 = vpop.xlane.xlu0 %1315
      %v1317 = vsel %vm934, %v1313, -inf
      %1318 = vmax.xlane.f32.xlu0 %v1317
      %v1319 = vpop.xlane.xlu0 %1318
      %v1320 = vsub.f32 %v1312, %v1316
      %v1321 = vsub.f32 %v1313, %v1319
      %v1322 = vmul.f32 %v1320, 1.442695
      %v1323 = vpow.pop %v1322
      %v1324 = vmul.f32 %v1321, 1.442695
      %v1325 = vpow.pop %v1324
      %v1326 = vsel %vm930, %v1323, 0.0
      %1327 = vadd.xlane.f32.xlu0 %v1326
      %v1328 = vpop.xlane.xlu0 %1327
      %v1329 = vsel %vm934, %v1325, 0.0
      %1330 = vadd.xlane.f32.xlu0 %v1329
      %v1331 = vpop.xlane.xlu0 %1330
      %v1332 = vrcp.pop %v1328
      %v1333 = vrcp.pop %v1331
      %v1334 = vmul.f32 %v1323, %v1332
      %v1335 = vmul.f32 %v1325, %v1333
      %v1336 = vpack.c.bf16 %v1335, %v1334
      %1337 = vrot.lane.b32.xlu0 %v874, 40
      %v1338 = vpop.permute.xlu0 %1337
      %v1340 = vsel %vm930, %v1336, 0
      %v1343 = vsel %vm960, %v1338, 0
      %1345 = vmatprep.subr.bf16.mxu0 0
      %1346 = vmatpush1.bf16.msra.mxu0 %v1343
      %1347 = vmatprep.subr.bf16.mxu0 0
      %1348 = vmatpush1.bf16.msra.mxu0 0
      %1349 = vmatprep.subr.bf16.mxu0 0
      %1350 = vmatpush1.bf16.msra.mxu0 0
      %1351 = vmatprep.subr.bf16.mxu0 0
      %1352 = vmatpush1.bf16.msra.mxu0 0
      %1353 = vmatprep.subr.bf16.mxu0 0
      %1354 = vmatpush1.bf16.msra.mxu0 0
      %1355 = vmatprep.subr.bf16.mxu0 0
      %1356 = vmatpush1.bf16.msra.mxu0 0
      %1357 = vmatprep.subr.bf16.mxu0 0
      %1358 = vmatpush1.bf16.msra.mxu0 0
      %1359 = vmatprep.subr.bf16.mxu0 0
      %1360 = vmatpush1.bf16.msra.mxu0 0
      %1361 = vmatprep.subr.bf16.mxu0 0
      %1362 = vmatpush1.bf16.msra.mxu0 0
      %1363 = vmatprep.subr.bf16.mxu0 0
      %1364 = vmatpush1.bf16.msra.mxu0 0
      %1365 = vmatprep.subr.bf16.mxu0 0
      %1366 = vmatpush1.bf16.msra.mxu0 0
      %1367 = vmatprep.subr.bf16.mxu0 0
      %1368 = vmatpush1.bf16.msra.mxu0 0
      %1369 = vmatprep.subr.bf16.mxu0 0
      %1370 = vmatpush1.bf16.msra.mxu0 0
      %1371 = vmatprep.subr.bf16.mxu0 0
      %1372 = vmatpush1.bf16.msra.mxu0 0
      %1373 = vmatprep.subr.bf16.mxu0 0
      %1374 = vmatpush1.bf16.msra.mxu0 0
      %1375 = vmatprep.subr.bf16.mxu0 0
      %1376 = vmatpush1.bf16.msra.mxu0 0
      %1377 = vmatprep.mubr.bf16.mxu0 0
      %1378 = vmatmul.mubr.bf16.gmra.mrb[0].mxu0 %v1340
      %v1379 = vpop.f32.mrb[0].mxu0
      %v1380 = vadd.f32 0.0, %v1379
      %v1381 = vpop.f32.mrb[0].mxu0
      %v1382 = vpop.f32.mrb[0].mxu0
      %v1383 = vadd.f32 0.0, %v1382
      %v1384 = vpop.f32.mrb[0].mxu0
      %1385 = vdwg.mxu0
      %1388 = vrot.lane.b32.xlu0 %v1126, 8
      %v1389 = vpop.permute.xlu0 %1388
      %1390 = vrot.lane.b32.xlu0 %v1129, 8
      %v1391 = vpop.permute.xlu0 %1390
      %1396 = vrot.lane.b32.xlu0 %v1253, 16
      %v1397 = vpop.permute.xlu0 %1396
      %1398 = vrot.lane.b32.xlu0 %v1256, 16
      %v1399 = vpop.permute.xlu0 %1398
      %1404 = vrot.lane.b32.xlu0 %v1380, 24
      %v1405 = vpop.permute.xlu0 %1404
      %1406 = vrot.lane.b32.xlu0 %v1383, 24
      %v1407 = vpop.permute.xlu0 %1406
      %v1410 = vsel %vm878, %v999, %v1389
      %v1411 = vsel %vm878, %v1002, %v1391
      %vm1412 = vcmask 130048
      %v1413 = vsel %vm1412, %v1410, %v1397
      %v1414 = vsel %vm1412, %v1411, %v1399
      %vm1415 = vcmask 195584
      %v1416 = vsel %vm1415, %v1413, %v1405
      %v1417 = vsel %vm1415, %v1414, %v1407
      %v1418 = vpack.c.bf16 %v1417, %v1416
      %v1419 = vld [vmem:[%s654] sm:$0xf]
      %v1420 = vld [vmem:[%s654 + $0x4] sm:$0xf]
      %v1421 = vld [vmem:[%s654 + $0x8] sm:$0xf]
      %v1422 = vld [vmem:[%s654 + $0xc] sm:$0xf]
      %v1427 = vunpack.c.l.b16 %v1419
      %v1428 = vunpack.c.l.b16 %v1420
      %v1429 = vunpack.c.l.b16 %v1421
      %v1430 = vunpack.c.l.b16 %v1422
      %v1431 = vpack.c.b16 %v1428, %v1427
      %v1432 = vpack.c.b16 %v1430, %v1429
      %v1436 = vsel %vm761, %v1418, 0
      %1438 = vmatprep.subr.bf16.mxu0 0
      %1439 = vmatpush1.bf16.msra.mxu0 %v1431
      %1440 = vmatprep.subr.bf16.mxu0 0
      %1441 = vmatpush1.bf16.msra.mxu0 %v1432
      %1442 = vmatprep.subr.bf16.mxu0 0
      %1443 = vmatpush1.bf16.msra.mxu0 0
      %1444 = vmatprep.subr.bf16.mxu0 0
      %1445 = vmatpush1.bf16.msra.mxu0 0
      %1446 = vmatprep.subr.bf16.mxu0 0
      %1447 = vmatpush1.bf16.msra.mxu0 0
      %1448 = vmatprep.subr.bf16.mxu0 0
      %1449 = vmatpush1.bf16.msra.mxu0 0
      %1450 = vmatprep.subr.bf16.mxu0 0
      %1451 = vmatpush1.bf16.msra.mxu0 0
      %1452 = vmatprep.subr.bf16.mxu0 0
      %1453 = vmatpush1.bf16.msra.mxu0 0
      %1454 = vmatprep.subr.bf16.mxu0 0
      %1455 = vmatpush1.bf16.msra.mxu0 0
      %1456 = vmatprep.subr.bf16.mxu0 0
      %1457 = vmatpush1.bf16.msra.mxu0 0
      %1458 = vmatprep.subr.bf16.mxu0 0
      %1459 = vmatpush1.bf16.msra.mxu0 0
      %1460 = vmatprep.subr.bf16.mxu0 0
      %1461 = vmatpush1.bf16.msra.mxu0 0
      %1462 = vmatprep.subr.bf16.mxu0 0
      %1463 = vmatpush1.bf16.msra.mxu0 0
      %1464 = vmatprep.subr.bf16.mxu0 0
      %1465 = vmatpush1.bf16.msra.mxu0 0
      %1466 = vmatprep.subr.bf16.mxu0 0
      %1467 = vmatpush1.bf16.msra.mxu0 0
      %1468 = vmatprep.subr.bf16.mxu0 0
      %1469 = vmatpush1.bf16.msra.mxu0 0
      %1470 = vmatprep.mubr.bf16.mxu0 0
      %1471 = vmatmul.mubr.bf16.gmra.mrb[0].mxu0 %v1436
      %v1472 = vpop.f32.mrb[0].mxu0
      %v1473 = vadd.f32 0.0, %v1472
      %v1474 = vpop.f32.mrb[0].mxu0
      %v1475 = vpop.f32.mrb[0].mxu0
      %v1476 = vadd.f32 0.0, %v1475
      %v1477 = vpop.f32.mrb[0].mxu0
      %1478 = vdwg.mxu0
      %v1479 = vadd.f32 %v742, %v1473
      %v1480 = vadd.f32 %v743, %v1476
      %v1481 = vld [vmem:[%s657] sm:$0x1]
      %v1483 = vlaneseq
      %v1484 = vshrl.u32 %v1483, 7
      %v1485 = vsub.s32 0, %v1484
      %v1486 = vrot.slane %v1481, %v1485
      %v1488 = vadd.f32 %v1479, %v1486
      %v1489 = vadd.f32 %v1480, %v1486
      %v1490 = vld [vmem:[%s660] sm:$0x1]
      %v1491 = vld [vmem:[%s663] sm:$0x1]
      %v1492 = vsel %vm761, %v1488, 0.0
      %1493 = vadd.xlane.f32.xlu0 %v1492
      %v1494 = vpop.xlane.xlu0 %1493
      %v1495 = vsel %vm765, %v1489, 0.0
      %1496 = vadd.xlane.f32.xlu0 %v1495
      %v1497 = vpop.xlane.xlu0 %1496
      %v1498 = vmul.f32 %v1494, %v769
      %v1499 = vmul.f32 %v1497, %v769
      %v1500 = vsub.f32 %v1488, %v1498
      %v1501 = vsub.f32 %v1489, %v1499
      %v1502 = vmul.f32 %v1500, %v1500
      %v1503 = vmul.f32 %v1501, %v1501
      %v1504 = vsel %vm761, %v1502, 0.0
      %1505 = vadd.xlane.f32.xlu0 %v1504
      %v1506 = vpop.xlane.xlu0 %1505
      %v1507 = vsel %vm765, %v1503, 0.0
      %1508 = vadd.xlane.f32.xlu0 %v1507
      %v1509 = vpop.xlane.xlu0 %1508
      %v1510 = vmul.f32 %v1506, %v769
      %v1511 = vmul.f32 %v1509, %v769
      %v1512 = vadd.f32 %v1510, 1e-06
      %v1513 = vadd.f32 %v1511, 1e-06
      %v1514 = vrsqrt.pop %v1512
      %v1515 = vrsqrt.pop %v1513
      %v1516 = vmul.f32 %v1500, %v1514
      %v1517 = vmul.f32 %v1501, %v1515
      %v1519 = vlaneseq
      %v1520 = vshrl.u32 %v1519, 7
      %v1521 = vsub.s32 0, %v1520
      %v1522 = vrot.slane %v1490, %v1521
      %v1524 = vmul.f32 %v1516, %v1522
      %v1525 = vmul.f32 %v1517, %v1522
      %v1527 = vlaneseq
      %v1528 = vshrl.u32 %v1527, 7
      %v1529 = vsub.s32 0, %v1528
      %v1530 = vrot.slane %v1491, %v1529
      %v1532 = vadd.f32 %v1524, %v1530
      %v1533 = vadd.f32 %v1525, %v1530
      %v1534 = vpack.c.bf16 %v1533, %v1532
      %v1535 = vld [vmem:[%s668] sm:$0xf]
      %v1536 = vld [vmem:[%s668 + $0x4] sm:$0xf]
      %v1537 = vld [vmem:[%s668 + $0x8] sm:$0xf]
      %v1538 = vld [vmem:[%s668 + $0xc] sm:$0xf]
      %v1539 = vld [vmem:[%s671] sm:$0x1]
      %v1541 = vlaneseq
      %v1542 = vshrl.u32 %v1541, 7
      %v1543 = vsub.s32 0, %v1542
      %v1544 = vrot.slane %v1539, %v1543
      %v1550 = vunpack.c.l.b16 %v1535
      %v1551 = vunpack.c.l.b16 %v1536
      %v1552 = vunpack.c.l.b16 %v1537
      %v1553 = vunpack.c.l.b16 %v1538
      %v1554 = vpack.c.b16 %v1551, %v1550
      %v1555 = vpack.c.b16 %v1553, %v1552
      %v1559 = vsel %vm761, %v1534, 0
      %1561 = vmatprep.subr.bf16.mxu0 0
      %1562 = vmatpush1.bf16.msra.mxu0 %v1554
      %1563 = vmatprep.subr.bf16.mxu0 0
      %1564 = vmatpush1.bf16.msra.mxu0 %v1555
      %1565 = vmatprep.subr.bf16.mxu0 0
      %1566 = vmatpush1.bf16.msra.mxu0 0
      %1567 = vmatprep.subr.bf16.mxu0 0
      %1568 = vmatpush1.bf16.msra.mxu0 0
      %1569 = vmatprep.subr.bf16.mxu0 0
      %1570 = vmatpush1.bf16.msra.mxu0 0
      %1571 = vmatprep.subr.bf16.mxu0 0
      %1572 = vmatpush1.bf16.msra.mxu0 0
      %1573 = vmatprep.subr.bf16.mxu0 0
      %1574 = vmatpush1.bf16.msra.mxu0 0
      %1575 = vmatprep.subr.bf16.mxu0 0
      %1576 = vmatpush1.bf16.msra.mxu0 0
      %1577 = vmatprep.subr.bf16.mxu0 0
      %1578 = vmatpush1.bf16.msra.mxu0 0
      %1579 = vmatprep.subr.bf16.mxu0 0
      %1580 = vmatpush1.bf16.msra.mxu0 0
      %1581 = vmatprep.subr.bf16.mxu0 0
      %1582 = vmatpush1.bf16.msra.mxu0 0
      %1583 = vmatprep.subr.bf16.mxu0 0
      %1584 = vmatpush1.bf16.msra.mxu0 0
      %1585 = vmatprep.subr.bf16.mxu0 0
      %1586 = vmatpush1.bf16.msra.mxu0 0
      %1587 = vmatprep.subr.bf16.mxu0 0
      %1588 = vmatpush1.bf16.msra.mxu0 0
      %1589 = vmatprep.subr.bf16.mxu0 0
      %1590 = vmatpush1.bf16.msra.mxu0 0
      %1591 = vmatprep.subr.bf16.mxu0 0
      %1592 = vmatpush1.bf16.msra.mxu0 0
      %1593 = vmatprep.mubr.bf16.mxu0 0
      %1594 = vmatmul.mubr.bf16.gmra.mrb[0].mxu0 %v1559
      %v1595 = vpop.f32.mrb[0].mxu0
      %v1596 = vadd.f32 %v1544, %v1595
      %v1597 = vpop.f32.mrb[0].mxu0
      %v1598 = vpop.f32.mrb[0].mxu0
      %v1599 = vadd.f32 %v1544, %v1598
      %v1600 = vpop.f32.mrb[0].mxu0
      %1601 = vdwg.mxu0
      %v1602 = vmul.f32 %v1596, 0.5
      %v1603 = vmul.f32 %v1599, 0.5
      %v1604 = vmul.f32 %v1596, 0.044715
      %v1605 = vmul.f32 %v1599, 0.044715
      %v1606 = vmul.f32 %v1604, %v1596
      %v1607 = vmul.f32 %v1605, %v1599
      %v1608 = vmul.f32 %v1606, %v1596
      %v1609 = vmul.f32 %v1607, %v1599
      %v1610 = vadd.f32 %v1596, %v1608
      %v1611 = vadd.f32 %v1599, %v1609
      %v1612 = vmul.f32 %v1610, 0.7978846
      %v1613 = vmul.f32 %v1611, 0.7978846
      %v1614 = vtanh.pop %v1612
      %v1615 = vtanh.pop %v1613
      %v1616 = vadd.f32 %v1614, 1.0
      %v1617 = vadd.f32 %v1615, 1.0
      %v1618 = vmul.f32 %v1602, %v1616
      %v1619 = vmul.f32 %v1603, %v1617
      %v1620 = vpack.c.bf16 %v1619, %v1618
      %v1621 = vld [vmem:[%s676] sm:$0xf]
      %v1622 = vld [vmem:[%s676 + $0x4] sm:$0xf]
      %v1623 = vld [vmem:[%s676 + $0x8] sm:$0xf]
      %v1624 = vld [vmem:[%s676 + $0xc] sm:$0xf]
      %v1625 = vld [vmem:[%s676 + $0x10] sm:$0xf]
      %v1626 = vld [vmem:[%s676 + $0x14] sm:$0xf]
      %v1627 = vld [vmem:[%s676 + $0x18] sm:$0xf]
      %v1628 = vld [vmem:[%s676 + $0x1c] sm:$0xf]
      %v1629 = vld [vmem:[%s676 + $0x20] sm:$0xf]
      %v1630 = vld [vmem:[%s676 + $0x24] sm:$0xf]
      %v1631 = vld [vmem:[%s676 + $0x28] sm:$0xf]
      %v1632 = vld [vmem:[%s676 + $0x2c] sm:$0xf]
      %v1633 = vld [vmem:[%s676 + $0x30] sm:$0xf]
      %v1634 = vld [vmem:[%s676 + $0x34] sm:$0xf]
      %v1635 = vld [vmem:[%s676 + $0x38] sm:$0xf]
      %v1636 = vld [vmem:[%s676 + $0x3c] sm:$0xf]
      %v1653 = vunpack.c.l.b16 %v1621
      %v1654 = vunpack.c.l.b16 %v1622
      %v1655 = vunpack.c.l.b16 %v1623
      %v1656 = vunpack.c.l.b16 %v1624
      %v1657 = vunpack.c.l.b16 %v1625
      %v1658 = vunpack.c.l.b16 %v1626
      %v1659 = vunpack.c.l.b16 %v1627
      %v1660 = vunpack.c.l.b16 %v1628
      %v1661 = vunpack.c.l.b16 %v1629
      %v1662 = vunpack.c.l.b16 %v1630
      %v1663 = vunpack.c.l.b16 %v1631
      %v1664 = vunpack.c.l.b16 %v1632
      %v1665 = vunpack.c.l.b16 %v1633
      %v1666 = vunpack.c.l.b16 %v1634
      %v1667 = vunpack.c.l.b16 %v1635
      %v1668 = vunpack.c.l.b16 %v1636
      %v1669 = vpack.c.b16 %v1654, %v1653
      %v1670 = vpack.c.b16 %v1656, %v1655
      %v1671 = vpack.c.b16 %v1658, %v1657
      %v1672 = vpack.c.b16 %v1660, %v1659
      %v1673 = vpack.c.b16 %v1662, %v1661
      %v1674 = vpack.c.b16 %v1664, %v1663
      %v1675 = vpack.c.b16 %v1666, %v1665
      %v1676 = vpack.c.b16 %v1668, %v1667
      %1685 = vmatprep.subr.bf16.mxu0 0
      %1686 = vmatpush1.bf16.msra.mxu0 %v1669
      %1687 = vmatprep.subr.bf16.mxu0 0
      %1688 = vmatpush1.bf16.msra.mxu0 %v1670
      %1689 = vmatprep.subr.bf16.mxu0 0
      %1690 = vmatpush1.bf16.msra.mxu0 %v1671
      %1691 = vmatprep.subr.bf16.mxu0 0
      %1692 = vmatpush1.bf16.msra.mxu0 %v1672
      %1693 = vmatprep.subr.bf16.mxu0 0
      %1694 = vmatpush1.bf16.msra.mxu0 %v1673
      %1695 = vmatprep.subr.bf16.mxu0 0
      %1696 = vmatpush1.bf16.msra.mxu0 %v1674
      %1697 = vmatprep.subr.bf16.mxu0 0
      %1698 = vmatpush1.bf16.msra.mxu0 %v1675
      %1699 = vmatprep.subr.bf16.mxu0 0
      %1700 = vmatpush1.bf16.msra.mxu0 %v1676
      %1701 = vmatprep.subr.bf16.mxu0 0
      %1702 = vmatpush1.bf16.msra.mxu0 0
      %1703 = vmatprep.subr.bf16.mxu0 0
      %1704 = vmatpush1.bf16.msra.mxu0 0
      %1705 = vmatprep.subr.bf16.mxu0 0
      %1706 = vmatpush1.bf16.msra.mxu0 0
      %1707 = vmatprep.subr.bf16.mxu0 0
      %1708 = vmatpush1.bf16.msra.mxu0 0
      %1709 = vmatprep.subr.bf16.mxu0 0
      %1710 = vmatpush1.bf16.msra.mxu0 0
      %1711 = vmatprep.subr.bf16.mxu0 0
      %1712 = vmatpush1.bf16.msra.mxu0 0
      %1713 = vmatprep.subr.bf16.mxu0 0
      %1714 = vmatpush1.bf16.msra.mxu0 0
      %1715 = vmatprep.subr.bf16.mxu0 0
      %1716 = vmatpush1.bf16.msra.mxu0 0
      %1717 = vmatprep.mubr.bf16.mxu0 0
      %1718 = vmatmul.mubr.bf16.gmra.mrb[0].mxu0 %v1620
      %v1719 = vpop.f32.mrb[0].mxu0
      %v1720 = vadd.f32 0.0, %v1719
      %v1721 = vpop.f32.mrb[0].mxu0
      %v1722 = vpop.f32.mrb[0].mxu0
      %v1723 = vadd.f32 0.0, %v1722
      %v1724 = vpop.f32.mrb[0].mxu0
      %1725 = vdwg.mxu0
      %v1726 = vadd.f32 %v1488, %v1720
      %v1727 = vadd.f32 %v1489, %v1723
      %v1728 = vld [vmem:[%s679] sm:$0x1]
      %v1730 = vlaneseq
      %v1731 = vshrl.u32 %v1730, 7
      %v1732 = vsub.s32 0, %v1731
      %v1733 = vrot.slane %v1728, %v1732
      %v1735 = vadd.f32 %v1726, %v1733
      %v1736 = vadd.f32 %v1727, %v1733
      %p1737 = scmp.lt.s32.totalorder %s28, 1
      // Predicated region
      $region126: #{sapiens_wrapper_forward.3} parent=83 // pred_check
        %p1738 = pneg %p1737
      $region127: #{sapiens_wrapper_forward.3} parent=83 // pred_check_branch
        %1740 = sbr.rel (%p1738) target = $region129
      $region128: #{sapiens_wrapper_forward.3} parent=83 // pred_region
        %1741 = vst.msk [vmem:[%s17] sm:$0xff] %vm761, %v1735
        %1742 = vst.msk [vmem:[%s17 + $0x8] sm:$0x3] %vm765, %v1736
      $region129: #{sapiens_wrapper_forward.3} parent=83 // pred_fallthru
        _
      %p1743 = scmp.eq.s32.totalorder %s28, 1
      // Predicated region
      $region130: #{sapiens_wrapper_forward.3} parent=83 // pred_check
        %p1744 = pneg %p1743
      $region131: #{sapiens_wrapper_forward.3} parent=83 // pred_check_branch
        %1746 = sbr.rel (%p1744) target = $region133
      $region132: #{sapiens_wrapper_forward.3} parent=83 // pred_region
        %v1747 = vld [vmem:[%s15] sm:$0x1]
        %v1748 = vld [vmem:[%s16] sm:$0x1]
        %v1749 = vsel %vm761, %v1735, 0.0
        %1750 = vadd.xlane.f32.xlu0 %v1749
        %v1751 = vpop.xlane.xlu0 %1750
        %v1752 = vsel %vm765, %v1736, 0.0
        %1753 = vadd.xlane.f32.xlu0 %v1752
        %v1754 = vpop.xlane.xlu0 %1753
        %v1755 = vmul.f32 %v1751, %v769
        %v1756 = vmul.f32 %v1754, %v769
        %v1757 = vsub.f32 %v1735, %v1755
        %v1758 = vsub.f32 %v1736, %v1756
        %v1759 = vmul.f32 %v1757, %v1757
        %v1760 = vmul.f32 %v1758, %v1758
        %v1761 = vsel %vm761, %v1759, 0.0
        %1762 = vadd.xlane.f32.xlu0 %v1761
        %v1763 = vpop.xlane.xlu0 %1762
        %v1764 = vsel %vm765, %v1760, 0.0
        %1765 = vadd.xlane.f32.xlu0 %v1764
        %v1766 = vpop.xlane.xlu0 %1765
        %v1767 = vmul.f32 %v1763, %v769
        %v1768 = vmul.f32 %v1766, %v769
        %v1769 = vadd.f32 %v1767, 1e-06
        %v1770 = vadd.f32 %v1768, 1e-06
        %v1771 = vrsqrt.pop %v1769
        %v1772 = vrsqrt.pop %v1770
        %v1773 = vmul.f32 %v1757, %v1771
        %v1774 = vmul.f32 %v1758, %v1772
        %v1776 = vlaneseq
        %v1777 = vshrl.u32 %v1776, 7
        %v1778 = vsub.s32 0, %v1777
        %v1779 = vrot.slane %v1747, %v1778
        %v1781 = vmul.f32 %v1773, %v1779
        %v1782 = vmul.f32 %v1774, %v1779
        %v1784 = vlaneseq
        %v1785 = vshrl.u32 %v1784, 7
        %v1786 = vsub.s32 0, %v1785
        %v1787 = vrot.slane %v1748, %v1786
        %v1789 = vadd.f32 %v1781, %v1787
        %v1790 = vadd.f32 %v1782, %v1787
        %1791 = vst.msk [vmem:[%s17] sm:$0xff] %vm761, %v1789
        %1792 = vst.msk [vmem:[%s17 + $0x8] sm:$0x3] %vm765, %v1790
      $region133: #{sapiens_wrapper_forward.3} parent=83 // pred_fallthru
        _
      // Predicated region
      $region134: #{sapiens_wrapper_forward.3} parent=83 // pred_check
        %p1793 = pneg %p437
      $region135: #{sapiens_wrapper_forward.3} parent=83 // pred_check_branch
        %1795 = sbr.rel (%p1793) target = $region137
      $region136: #{sapiens_wrapper_forward.3} parent=83 // pred_region
        _
      $region137: #{sapiens_wrapper_forward.3} parent=83 // pred_fallthru
        _
      // Predicated region
      $region138: #{sapiens_wrapper_forward.3} parent=83 // pred_check
        %p1796 = pneg %p437
      $region139: #{sapiens_wrapper_forward.3} parent=83 // pred_check_branch
        %1798 = sbr.rel (%p1796) target = $region141
      $region140: #{sapiens_wrapper_forward.3} parent=83 // pred_region
        _
      $region141: #{sapiens_wrapper_forward.3} parent=83 // pred_fallthru
        _
    $region84: #{sapiens_wrapper_forward.3} parent=5 // pred_fallthru
      _
    %p1799 = scmp.le.s32.totalorder 2, %s23
    // Predicated region
    $region142: #{sapiens_wrapper_forward.3} parent=5 // pred_check
      %p1800 = pneg %p1799
    $region143: #{sapiens_wrapper_forward.3} parent=5 // pred_check_branch
      %1802 = sbr.rel (%p1800) target = $region145
    $region144: #{sapiens_wrapper_forward.3} parent=5 // pred_region
      %s1803 = ssub.s32 %s23, 2
    $region145: #{sapiens_wrapper_forward.3} parent=5 // pred_fallthru
      _
  $region6: #{sapiens_wrapper_forward.3} parent=0 // loop_footer
    %s27 = sadd.s32 1, %s23
  $region7: #{sapiens_wrapper_forward.3} parent=0 // loop_footer_branch
    %22 = sbr.rel target = $region3
  $region8: #{sapiens_wrapper_forward.3} parent=0 // loop_exit
    _
  %1804 = vsyncmov [#allocation2]
  %s1805 = vpop.sfrf %1804
  %p1806 = scmp.eq.s32.totalorder %s1805, 0
  %p1807 = pneg %p1806
  %1809 = shalt.err (%p1807)

</llo_original>
